<compile_context>
chip_gen: v5e
topology: v5e:2x2
jax: 0.10.0
libtpu: 0.0.40
codegen_flags: <defaults>
</compile_context>

<pallas_src>
import functools

import jax
import jax.numpy as jnp
from jax.experimental import pallas as pl
from jax.experimental.pallas import tpu as pltpu


# ---------------------------------------------------------------------------
# Shared traced helper: full bidirectional LSTM recurrence (runs inside kernels).
#   x_ref   : (S*B, E)   time-major flat input rows
#   wih_ref : (E, 8H)    input projection [fwd gates 4H | bwd gates 4H] (i,f,g,o order)
#   b_ref   : (1, 8H)    fused bias (b_ih + b_hh) for both directions
#   whh_ref : (2H, 8H)   block-diagonal recurrent weights blockdiag(Whh_f, Whh_b)
#   gx_ref  : (S*B, 8H)  VMEM scratch holding the hoisted input projection
# Returns (h_f_list, h_b_list, fh) with fh = [h_fwd(T-1) | h_bwd(0)]  (B, 2H).
# ---------------------------------------------------------------------------
def _bilstm_recurrence(x_ref, wih_ref, b_ref, whh_ref, gx_ref, seq_len, batch):
    S, B = seq_len, batch
    H = whh_ref.shape[0] // 2
    G = 4 * H

    # Hoisted input projection for BOTH directions: ONE MXU matmul at kernel
    # entry; gx lives only in VMEM scratch (never goes to HBM).
    gx_ref[...] = (
        jnp.dot(x_ref[...], wih_ref[...], preferred_element_type=jnp.float32)
        + b_ref[...])

    whh = whh_ref[...]                       # (2H, 8H), resident for the whole loop

    zeros = jnp.zeros((B, H), jnp.float32)
    h_f, c_f = zeros, zeros
    h_b, c_b = zeros, zeros
    h_f_list = [None] * S
    h_b_list = [None] * S

    # Fully-unrolled time loop (S is small & static): forward walks t = 0..S-1,
    # backward walks S-1..0, sharing one fused block-diagonal recurrent matmul
    # and full-width sigmoid/tanh per step.
    for t in range(S):
        tb = S - 1 - t
        hc = jnp.concatenate([h_f, h_b], axis=1)                      # (B, 2H)
        rec = jnp.dot(hc, whh, preferred_element_type=jnp.float32)    # (B, 8H)
        gates = jnp.concatenate(
            [gx_ref[t * B:(t + 1) * B, 0:G],            # fwd gates at time t
             gx_ref[tb * B:(tb + 1) * B, G:2 * G]],     # bwd gates at time S-1-t
            axis=1) + rec                                             # (B, 8H)

        # Full-lane-width activations once; slice i/f/g/o per direction after.
        sig = jax.nn.sigmoid(gates)
        tnh = jnp.tanh(gates)

        # forward cell (PyTorch gate order i, f, g, o)
        c_f = sig[:, H:2 * H] * c_f + sig[:, 0:H] * tnh[:, 2 * H:3 * H]
        h_f = sig[:, 3 * H:4 * H] * jnp.tanh(c_f)
        # backward cell
        c_b = (sig[:, G + H:G + 2 * H] * c_b
               + sig[:, G:G + H] * tnh[:, G + 2 * H:G + 3 * H])
        h_b = sig[:, G + 3 * H:G + 4 * H] * jnp.tanh(c_b)

        h_f_list[t] = h_f
        h_b_list[tb] = h_b

    fh = jnp.concatenate([h_f, h_b], axis=1)   # fwd final (t=S-1) | bwd final (t=0)
    return h_f_list, h_b_list, fh


# ---------------------------------------------------------------------------
# Kernel A: intermediate BiLSTM layer (only used when num_layers > 1).
# Outputs the time-aligned hidden sequence flat as (S*B, 2H).
# ---------------------------------------------------------------------------
def _bilstm_layer_kernel(x_ref, wih_ref, b_ref, whh_ref, hseq_ref, gx_ref,
                         *, seq_len, batch):
    B = batch
    h_f_list, h_b_list, _ = _bilstm_recurrence(
        x_ref, wih_ref, b_ref, whh_ref, gx_ref, seq_len, batch)
    # One contiguous (B, 2H) store per time index (no 32-lane partial writes).
    for t in range(seq_len):
        hseq_ref[t * B:(t + 1) * B, :] = jnp.concatenate(
            [h_f_list[t], h_b_list[t]], axis=1)


def bilstm_layer_pallas(x2d, wih, b, whh_blk, seq_len, batch):
    H = whh_blk.shape[0] // 2
    kernel = functools.partial(_bilstm_layer_kernel, seq_len=seq_len, batch=batch)
    return pl.pallas_call(
        kernel,
        out_shape=jax.ShapeDtypeStruct((seq_len * batch, 2 * H), jnp.float32),
        in_specs=[pl.BlockSpec(memory_space=pltpu.MemorySpace.VMEM)] * 4,
        out_specs=pl.BlockSpec(memory_space=pltpu.MemorySpace.VMEM),
        scratch_shapes=[pltpu.VMEM((seq_len * batch, 8 * H), jnp.float32)],
    )(x2d, wih, b, whh_blk)


# ---------------------------------------------------------------------------
# Kernel B: last BiLSTM layer + attention + (split) Linear + softmax, all fused.
# The hidden sequence never leaves the kernel; output is just (B, O) probs.
# ---------------------------------------------------------------------------
def _bilstm_attn_fc_kernel(x_ref, wih_ref, b_ref, whh_ref, fcw_ref, fcb_ref,
                           out_ref, gx_ref, *, seq_len, batch):
    S, B = seq_len, batch
    H = whh_ref.shape[0] // 2
    D = 2 * H

    h_f_list, h_b_list, fh = _bilstm_recurrence(
        x_ref, wih_ref, b_ref, whh_ref, gx_ref, S, B)

    # Combined per-time hidden states, kept in registers/VMEM (never HBM).
    rnn = [jnp.concatenate([h_f_list[t], h_b_list[t]], axis=1) for t in range(S)]

    # Attention: scores laid out (B, S) -> softmax reduces over the lane (seq) axis.
    scores = jnp.concatenate(
        [jnp.sum(rnn[t] * fh, axis=-1, keepdims=True) for t in range(S)], axis=1)
    scores = scores - jnp.max(scores, axis=1, keepdims=True)
    e = jnp.exp(scores)
    w_att = e / jnp.sum(e, axis=1, keepdims=True)                     # (B, S)

    attn = rnn[0] * w_att[:, 0:1]
    for t in range(1, S):
        attn = attn + rnn[t] * w_att[:, t:t + 1]                      # (B, D)

    # TODO(synk): nn.Dropout is identity in eval mode; no stochastic mask applied.
    # Split FC matmul (avoids concatenating [fh, attn] at a non-128 lane boundary).
    logits = (jnp.dot(fh, fcw_ref[0:D, :], preferred_element_type=jnp.float32)
              + jnp.dot(attn, fcw_ref[D:2 * D, :], preferred_element_type=jnp.float32)
              + fcb_ref[...])                                         # (B, O)

    logits = logits - jnp.max(logits, axis=1, keepdims=True)
    el = jnp.exp(logits)
    out_ref[...] = (el / jnp.sum(el, axis=1, keepdims=True)).astype(out_ref.dtype)


def bilstm_attn_fc_pallas(x2d, wih, b, whh_blk, fc_w, fc_b, seq_len, batch):
    H = whh_blk.shape[0] // 2
    O = fc_w.shape[1]
    kernel = functools.partial(_bilstm_attn_fc_kernel, seq_len=seq_len, batch=batch)
    return pl.pallas_call(
        kernel,
        out_shape=jax.ShapeDtypeStruct((batch, O), jnp.float32),
        in_specs=[pl.BlockSpec(memory_space=pltpu.MemorySpace.VMEM)] * 6,
        out_specs=pl.BlockSpec(memory_space=pltpu.MemorySpace.VMEM),
        scratch_shapes=[pltpu.VMEM((seq_len * batch, 8 * H), jnp.float32)],
    )(x2d, wih, b, whh_blk, fc_w, fc_b)


# ---------------------------------------------------------------------------
# Full forward pass (glue in plain JAX: embedding gather + block-diag weight build).
# ---------------------------------------------------------------------------
@jax.jit
def seq2seq_attention_forward(tokens, params):
    S, B = tokens.shape
    # Frozen embedding lookup (gather) stays in XLA.
    x = params["embeddings"][tokens].astype(jnp.float32)              # (S, B, E)
    x2d = x.reshape(S * B, -1)                                        # time-major rows

    n_layers = len(params["lstm_layers"])
    out = None
    for li, layer in enumerate(params["lstm_layers"]):
        H = layer["whh_f"].shape[0]
        G = 4 * H
        zero = jnp.zeros((H, G), jnp.float32)
        whh_blk = jnp.concatenate(
            [jnp.concatenate([layer["whh_f"], zero], axis=1),
             jnp.concatenate([zero, layer["whh_b"]], axis=1)], axis=0)  # (2H, 8H)
        if li < n_layers - 1:
            x2d = bilstm_layer_pallas(x2d, layer["wih"], layer["b"], whh_blk, S, B)
        else:
            out = bilstm_attn_fc_pallas(x2d, layer["wih"], layer["b"], whh_blk,
                                        params["fc_w"], params["fc_b"], S, B)
    return out                                                        # (B, O)


# ---------------------------------------------------------------------------
# Pure-JAX reference (for correctness check).
# ---------------------------------------------------------------------------
def _lstm_layer_ref(x_seq, wih, whh, b):
    S, B, _ = x_seq.shape
    H = whh.shape[0]

    def step(carry, x_t):
        h, c = carry
        gates = x_t @ wih + h @ whh + b[0]
        i_g = jax.nn.sigmoid(gates[:, :H])
        f_g = jax.nn.sigmoid(gates[:, H:2 * H])
        g_g = jnp.tanh(gates[:, 2 * H:3 * H])
        o_g = jax.nn.sigmoid(gates[:, 3 * H:])
        c = f_g * c + i_g * g_g
        h = o_g * jnp.tanh(c)
        return (h, c), h

    init = (jnp.zeros((B, H), jnp.float32), jnp.zeros((B, H), jnp.float32))
    _, hs = jax.lax.scan(step, init, x_seq)
    return hs


def _forward_ref(tokens, params):
    inp = params["embeddings"][tokens].astype(jnp.float32)
    for layer in params["lstm_layers"]:
        G = layer["whh_f"].shape[1]                     # 4H
        wih_f, wih_b = layer["wih"][:, :G], layer["wih"][:, G:]
        b_f, b_b = layer["b"][:, :G], layer["b"][:, G:]
        h_f = _lstm_layer_ref(inp, wih_f, layer["whh_f"], b_f)
        h_b_rev = _lstm_layer_ref(inp[::-1], wih_b, layer["whh_b"], b_b)
        h_b = h_b_rev[::-1]
        inp = jnp.concatenate([h_f, h_b], axis=-1)
        h_n_f, h_n_b = h_f[-1], h_b_rev[-1]
    fh = jnp.concatenate([h_n_f, h_n_b], axis=1)
    rnn = jnp.transpose(inp, (1, 0, 2))
    scores = jnp.einsum("bsd,bd->bs", rnn, fh)
    w_att = jax.nn.softmax(scores, axis=1)
    attn = jnp.einsum("bsd,bs->bd", rnn, w_att)
    feat = jnp.concatenate([fh, attn], axis=1)
    logits = feat @ params["fc_w"] + params["fc_b"]
    return jax.nn.softmax(logits, axis=1)


# ---------------------------------------------------------------------------
def make_params(key, vocab_size, embed_size, hidden_size, num_layers, output_size):
    keys = iter(jax.random.split(key, 64))
    scale = 1.0 / jnp.sqrt(hidden_size)

    def u(shape):
        return jax.random.uniform(next(keys), shape, jnp.float32, -scale, scale)

    layers = []
    in_size = embed_size
    for _ in range(num_layers):
        layers.append(dict(
            wih=u((in_size, 8 * hidden_size)),    # [W_ih_fwd | W_ih_bwd]
            whh_f=u((hidden_size, 4 * hidden_size)),
            whh_b=u((hidden_size, 4 * hidden_size)),
            b=u((1, 8 * hidden_size)),            # [b_fwd | b_bwd]  (b_ih + b_hh fused)
        ))
        in_size = 2 * hidden_size

    return dict(
        embeddings=jax.random.normal(next(keys), (vocab_size, embed_size), jnp.float32),
        lstm_layers=layers,
        fc_w=u((4 * hidden_size, output_size)),   # Linear(2H * 2 -> O), stored transposed
        fc_b=u((1, output_size)),
    )


if __name__ == "__main__":
    # args: embed_size=32, hidden_size=32, hidden_layers=1, bidirectional=True, output_size=4
    SEQ_LEN, BATCH, VOCAB = 8, 2, 50
    EMBED, HIDDEN, LAYERS, OUT = 32, 32, 1, 4

    key = jax.random.PRNGKey(0)
    k_tok, k_par = jax.random.split(key)
    tokens = jax.random.randint(k_tok, (SEQ_LEN, BATCH), 0, VOCAB, dtype=jnp.int32)
    params = make_params(k_par, VOCAB, EMBED, HIDDEN, LAYERS, OUT)

    out = seq2seq_attention_forward(tokens, params)
    out = jax.block_until_ready(out)

    ref = _forward_ref(tokens, params)
    assert out.shape == (BATCH, OUT), out.shape
    assert jnp.allclose(out, ref, rtol=1e-3, atol=1e-4), (out, ref)
    assert jnp.allclose(jnp.sum(out, axis=1), 1.0, atol=1e-5)

    print("KERNEL_OK")
</pallas_src>

<mosaic_0001>
module attributes {stable_mosaic.version = 11 : i64} {
  func.func @_bilstm_attn_fc_kernel(%arg0: memref<16x32xf32, #tpu.memory_space<vmem>>, %arg1: memref<32x256xf32, #tpu.memory_space<vmem>>, %arg2: memref<1x256xf32, #tpu.memory_space<vmem>>, %arg3: memref<64x256xf32, #tpu.memory_space<vmem>>, %arg4: memref<128x4xf32, #tpu.memory_space<vmem>>, %arg5: memref<1x4xf32, #tpu.memory_space<vmem>>, %arg6: memref<2x4xf32, #tpu.memory_space<vmem>>, %arg7: memref<16x256xf32, #tpu.memory_space<vmem>>) attributes {dimension_semantics = [], scalar_prefetch = 0 : i64, scratch_operands = 1 : i64, tpu.core_type = #tpu.core_type<tc>} {
    %c0 = arith.constant 0 : index
    %c0_0 = arith.constant 0 : index
    %0 = vector.load %arg0[%c0, %c0_0] : memref<16x32xf32, #tpu.memory_space<vmem>>, vector<16x32xf32>
    %c0_1 = arith.constant 0 : index
    %c0_2 = arith.constant 0 : index
    %1 = vector.load %arg1[%c0_1, %c0_2] : memref<32x256xf32, #tpu.memory_space<vmem>>, vector<32x256xf32>
    %cst = arith.constant dense<0.000000e+00> : vector<16x256xf32>
    %2 = tpu.matmul %0, %1, %cst {dimension_numbers = #tpu.dot_dimension_numbers<[1], [0], [0], [1], [0, 0, 1, 1], [], []>} : vector<16x32xf32>, vector<32x256xf32>, vector<16x256xf32> -> vector<16x256xf32>
    %c0_3 = arith.constant 0 : index
    %c0_4 = arith.constant 0 : index
    %3 = vector.load %arg2[%c0_3, %c0_4] : memref<1x256xf32, #tpu.memory_space<vmem>>, vector<1x256xf32>
    %4 = vector.broadcast %3 : vector<1x256xf32> to vector<16x256xf32>
    %5 = arith.addf %2, %4 : vector<16x256xf32>
    %c0_5 = arith.constant 0 : index
    %c0_6 = arith.constant 0 : index
    %6 = vector.load %arg7[%c0_5, %c0_6] : memref<16x256xf32, #tpu.memory_space<vmem>>, vector<16x256xf32>
    tpu.vector_store %arg7[%c0_5, %c0_6], %5 {strides = array<i32>} : memref<16x256xf32, #tpu.memory_space<vmem>>, vector<16x256xf32>,
    %c0_7 = arith.constant 0 : index
    %c0_8 = arith.constant 0 : index
    %7 = vector.load %arg3[%c0_7, %c0_8] : memref<64x256xf32, #tpu.memory_space<vmem>>, vector<64x256xf32>
    %cst_9 = arith.constant 0.000000e+00 : f32
    %8 = vector.broadcast %cst_9 : f32 to vector<2x32xf32>
    %9 = tpu.concatenate %8, %8 in 1 : vector<2x32xf32>, vector<2x32xf32> -> vector<2x64xf32>
    %cst_10 = arith.constant dense<0.000000e+00> : vector<2x256xf32>
    %10 = tpu.matmul %9, %7, %cst_10 {dimension_numbers = #tpu.dot_dimension_numbers<[1], [0], [0], [1], [0, 0, 1, 1], [], []>} : vector<2x64xf32>, vector<64x256xf32>, vector<2x256xf32> -> vector<2x256xf32>
    %c0_11 = arith.constant 0 : index
    %c0_12 = arith.constant 0 : index
    %11 = vector.load %arg7[%c0_11, %c0_12] : memref<16x256xf32, #tpu.memory_space<vmem>>, vector<2x128xf32>
    %c14 = arith.constant 14 : index
    %c128 = arith.constant 128 : index
    %12 = vector.load %arg7[%c14, %c128] : memref<16x256xf32, #tpu.memory_space<vmem>>, vector<2x128xf32>
    %13 = tpu.concatenate %11, %12 in 1 : vector<2x128xf32>, vector<2x128xf32> -> vector<2x256xf32>
    %14 = arith.addf %13, %10 : vector<2x256xf32>
    %15 = arith.negf %14 : vector<2x256xf32>
    %16 = math.exp %15 : vector<2x256xf32>
    %cst_13 = arith.constant 1.000000e+00 : f32
    %17 = vector.broadcast %cst_13 : f32 to vector<2x256xf32>
    %18 = arith.addf %17, %16 : vector<2x256xf32>
    %19 = arith.divf %17, %18 : vector<2x256xf32>
    %20 = math.tanh %14 : vector<2x256xf32>
    %21 = vector.extract_strided_slice %19 {offsets = [0, 32], sizes = [2, 32], strides = [1, 1]} : vector<2x256xf32> to vector<2x32xf32>
    %22 = arith.mulf %21, %8 : vector<2x32xf32>
    %23 = vector.extract_strided_slice %19 {offsets = [0, 0], sizes = [2, 32], strides = [1, 1]} : vector<2x256xf32> to vector<2x32xf32>
    %24 = vector.extract_strided_slice %20 {offsets = [0, 64], sizes = [2, 32], strides = [1, 1]} : vector<2x256xf32> to vector<2x32xf32>
    %25 = arith.mulf %23, %24 : vector<2x32xf32>
    %26 = arith.addf %22, %25 : vector<2x32xf32>
    %27 = vector.extract_strided_slice %19 {offsets = [0, 96], sizes = [2, 32], strides = [1, 1]} : vector<2x256xf32> to vector<2x32xf32>
    %28 = math.tanh %26 : vector<2x32xf32>
    %29 = arith.mulf %27, %28 : vector<2x32xf32>
    %30 = vector.extract_strided_slice %19 {offsets = [0, 160], sizes = [2, 32], strides = [1, 1]} : vector<2x256xf32> to vector<2x32xf32>
    %31 = arith.mulf %30, %8 : vector<2x32xf32>
    %32 = vector.extract_strided_slice %19 {offsets = [0, 128], sizes = [2, 32], strides = [1, 1]} : vector<2x256xf32> to vector<2x32xf32>
    %33 = vector.extract_strided_slice %20 {offsets = [0, 192], sizes = [2, 32], strides = [1, 1]} : vector<2x256xf32> to vector<2x32xf32>
    %34 = arith.mulf %32, %33 : vector<2x32xf32>
    %35 = arith.addf %31, %34 : vector<2x32xf32>
    %36 = vector.extract_strided_slice %19 {offsets = [0, 224], sizes = [2, 32], strides = [1, 1]} : vector<2x256xf32> to vector<2x32xf32>
    %37 = math.tanh %35 : vector<2x32xf32>
    %38 = arith.mulf %36, %37 : vector<2x32xf32>
    %39 = tpu.concatenate %29, %38 in 1 : vector<2x32xf32>, vector<2x32xf32> -> vector<2x64xf32>
    %cst_14 = arith.constant dense<0.000000e+00> : vector<2x256xf32>
    %40 = tpu.matmul %39, %7, %cst_14 {dimension_numbers = #tpu.dot_dimension_numbers<[1], [0], [0], [1], [0, 0, 1, 1], [], []>} : vector<2x64xf32>, vector<64x256xf32>, vector<2x256xf32> -> vector<2x256xf32>
    %c2 = arith.constant 2 : index
    %c0_15 = arith.constant 0 : index
    %41 = vector.load %arg7[%c2, %c0_15] : memref<16x256xf32, #tpu.memory_space<vmem>>, vector<2x128xf32>
    %c12 = arith.constant 12 : index
    %c128_16 = arith.constant 128 : index
    %42 = vector.load %arg7[%c12, %c128_16] : memref<16x256xf32, #tpu.memory_space<vmem>>, vector<2x128xf32>
    %43 = tpu.concatenate %41, %42 in 1 : vector<2x128xf32>, vector<2x128xf32> -> vector<2x256xf32>
    %44 = arith.addf %43, %40 : vector<2x256xf32>
    %45 = arith.negf %44 : vector<2x256xf32>
    %46 = math.exp %45 : vector<2x256xf32>
    %cst_17 = arith.constant 1.000000e+00 : f32
    %47 = vector.broadcast %cst_17 : f32 to vector<2x256xf32>
    %48 = arith.addf %47, %46 : vector<2x256xf32>
    %49 = arith.divf %47, %48 : vector<2x256xf32>
    %50 = math.tanh %44 : vector<2x256xf32>
    %51 = vector.extract_strided_slice %49 {offsets = [0, 32], sizes = [2, 32], strides = [1, 1]} : vector<2x256xf32> to vector<2x32xf32>
    %52 = arith.mulf %51, %26 : vector<2x32xf32>
    %53 = vector.extract_strided_slice %49 {offsets = [0, 0], sizes = [2, 32], strides = [1, 1]} : vector<2x256xf32> to vector<2x32xf32>
    %54 = vector.extract_strided_slice %50 {offsets = [0, 64], sizes = [2, 32], strides = [1, 1]} : vector<2x256xf32> to vector<2x32xf32>
    %55 = arith.mulf %53, %54 : vector<2x32xf32>
    %56 = arith.addf %52, %55 : vector<2x32xf32>
    %57 = vector.extract_strided_slice %49 {offsets = [0, 96], sizes = [2, 32], strides = [1, 1]} : vector<2x256xf32> to vector<2x32xf32>
    %58 = math.tanh %56 : vector<2x32xf32>
    %59 = arith.mulf %57, %58 : vector<2x32xf32>
    %60 = vector.extract_strided_slice %49 {offsets = [0, 160], sizes = [2, 32], strides = [1, 1]} : vector<2x256xf32> to vector<2x32xf32>
    %61 = arith.mulf %60, %35 : vector<2x32xf32>
    %62 = vector.extract_strided_slice %49 {offsets = [0, 128], sizes = [2, 32], strides = [1, 1]} : vector<2x256xf32> to vector<2x32xf32>
    %63 = vector.extract_strided_slice %50 {offsets = [0, 192], sizes = [2, 32], strides = [1, 1]} : vector<2x256xf32> to vector<2x32xf32>
    %64 = arith.mulf %62, %63 : vector<2x32xf32>
    %65 = arith.addf %61, %64 : vector<2x32xf32>
    %66 = vector.extract_strided_slice %49 {offsets = [0, 224], sizes = [2, 32], strides = [1, 1]} : vector<2x256xf32> to vector<2x32xf32>
    %67 = math.tanh %65 : vector<2x32xf32>
    %68 = arith.mulf %66, %67 : vector<2x32xf32>
    %69 = tpu.concatenate %59, %68 in 1 : vector<2x32xf32>, vector<2x32xf32> -> vector<2x64xf32>
    %cst_18 = arith.constant dense<0.000000e+00> : vector<2x256xf32>
    %70 = tpu.matmul %69, %7, %cst_18 {dimension_numbers = #tpu.dot_dimension_numbers<[1], [0], [0], [1], [0, 0, 1, 1], [], []>} : vector<2x64xf32>, vector<64x256xf32>, vector<2x256xf32> -> vector<2x256xf32>
    %c4 = arith.constant 4 : index
    %c0_19 = arith.constant 0 : index
    %71 = vector.load %arg7[%c4, %c0_19] : memref<16x256xf32, #tpu.memory_space<vmem>>, vector<2x128xf32>
    %c10 = arith.constant 10 : index
    %c128_20 = arith.constant 128 : index
    %72 = vector.load %arg7[%c10, %c128_20] : memref<16x256xf32, #tpu.memory_space<vmem>>, vector<2x128xf32>
    %73 = tpu.concatenate %71, %72 in 1 : vector<2x128xf32>, vector<2x128xf32> -> vector<2x256xf32>
    %74 = arith.addf %73, %70 : vector<2x256xf32>
    %75 = arith.negf %74 : vector<2x256xf32>
    %76 = math.exp %75 : vector<2x256xf32>
    %cst_21 = arith.constant 1.000000e+00 : f32
    %77 = vector.broadcast %cst_21 : f32 to vector<2x256xf32>
    %78 = arith.addf %77, %76 : vector<2x256xf32>
    %79 = arith.divf %77, %78 : vector<2x256xf32>
    %80 = math.tanh %74 : vector<2x256xf32>
    %81 = vector.extract_strided_slice %79 {offsets = [0, 32], sizes = [2, 32], strides = [1, 1]} : vector<2x256xf32> to vector<2x32xf32>
    %82 = arith.mulf %81, %56 : vector<2x32xf32>
    %83 = vector.extract_strided_slice %79 {offsets = [0, 0], sizes = [2, 32], strides = [1, 1]} : vector<2x256xf32> to vector<2x32xf32>
    %84 = vector.extract_strided_slice %80 {offsets = [0, 64], sizes = [2, 32], strides = [1, 1]} : vector<2x256xf32> to vector<2x32xf32>
    %85 = arith.mulf %83, %84 : vector<2x32xf32>
    %86 = arith.addf %82, %85 : vector<2x32xf32>
    %87 = vector.extract_strided_slice %79 {offsets = [0, 96], sizes = [2, 32], strides = [1, 1]} : vector<2x256xf32> to vector<2x32xf32>
    %88 = math.tanh %86 : vector<2x32xf32>
    %89 = arith.mulf %87, %88 : vector<2x32xf32>
    %90 = vector.extract_strided_slice %79 {offsets = [0, 160], sizes = [2, 32], strides = [1, 1]} : vector<2x256xf32> to vector<2x32xf32>
    %91 = arith.mulf %90, %65 : vector<2x32xf32>
    %92 = vector.extract_strided_slice %79 {offsets = [0, 128], sizes = [2, 32], strides = [1, 1]} : vector<2x256xf32> to vector<2x32xf32>
    %93 = vector.extract_strided_slice %80 {offsets = [0, 192], sizes = [2, 32], strides = [1, 1]} : vector<2x256xf32> to vector<2x32xf32>
    %94 = arith.mulf %92, %93 : vector<2x32xf32>
    %95 = arith.addf %91, %94 : vector<2x32xf32>
    %96 = vector.extract_strided_slice %79 {offsets = [0, 224], sizes = [2, 32], strides = [1, 1]} : vector<2x256xf32> to vector<2x32xf32>
    %97 = math.tanh %95 : vector<2x32xf32>
    %98 = arith.mulf %96, %97 : vector<2x32xf32>
    %99 = tpu.concatenate %89, %98 in 1 : vector<2x32xf32>, vector<2x32xf32> -> vector<2x64xf32>
    %cst_22 = arith.constant dense<0.000000e+00> : vector<2x256xf32>
    %100 = tpu.matmul %99, %7, %cst_22 {dimension_numbers = #tpu.dot_dimension_numbers<[1], [0], [0], [1], [0, 0, 1, 1], [], []>} : vector<2x64xf32>, vector<64x256xf32>, vector<2x256xf32> -> vector<2x256xf32>
    %c6 = arith.constant 6 : index
    %c0_23 = arith.constant 0 : index
    %101 = vector.load %arg7[%c6, %c0_23] : memref<16x256xf32, #tpu.memory_space<vmem>>, vector<2x128xf32>
    %c8 = arith.constant 8 : index
    %c128_24 = arith.constant 128 : index
    %102 = vector.load %arg7[%c8, %c128_24] : memref<16x256xf32, #tpu.memory_space<vmem>>, vector<2x128xf32>
    %103 = tpu.concatenate %101, %102 in 1 : vector<2x128xf32>, vector<2x128xf32> -> vector<2x256xf32>
    %104 = arith.addf %103, %100 : vector<2x256xf32>
    %105 = arith.negf %104 : vector<2x256xf32>
    %106 = math.exp %105 : vector<2x256xf32>
    %cst_25 = arith.constant 1.000000e+00 : f32
    %107 = vector.broadcast %cst_25 : f32 to vector<2x256xf32>
    %108 = arith.addf %107, %106 : vector<2x256xf32>
    %109 = arith.divf %107, %108 : vector<2x256xf32>
    %110 = math.tanh %104 : vector<2x256xf32>
    %111 = vector.extract_strided_slice %109 {offsets = [0, 32], sizes = [2, 32], strides = [1, 1]} : vector<2x256xf32> to vector<2x32xf32>
    %112 = arith.mulf %111, %86 : vector<2x32xf32>
    %113 = vector.extract_strided_slice %109 {offsets = [0, 0], sizes = [2, 32], strides = [1, 1]} : vector<2x256xf32> to vector<2x32xf32>
    %114 = vector.extract_strided_slice %110 {offsets = [0, 64], sizes = [2, 32], strides = [1, 1]} : vector<2x256xf32> to vector<2x32xf32>
    %115 = arith.mulf %113, %114 : vector<2x32xf32>
    %116 = arith.addf %112, %115 : vector<2x32xf32>
    %117 = vector.extract_strided_slice %109 {offsets = [0, 96], sizes = [2, 32], strides = [1, 1]} : vector<2x256xf32> to vector<2x32xf32>
    %118 = math.tanh %116 : vector<2x32xf32>
    %119 = arith.mulf %117, %118 : vector<2x32xf32>
    %120 = vector.extract_strided_slice %109 {offsets = [0, 160], sizes = [2, 32], strides = [1, 1]} : vector<2x256xf32> to vector<2x32xf32>
    %121 = arith.mulf %120, %95 : vector<2x32xf32>
    %122 = vector.extract_strided_slice %109 {offsets = [0, 128], sizes = [2, 32], strides = [1, 1]} : vector<2x256xf32> to vector<2x32xf32>
    %123 = vector.extract_strided_slice %110 {offsets = [0, 192], sizes = [2, 32], strides = [1, 1]} : vector<2x256xf32> to vector<2x32xf32>
    %124 = arith.mulf %122, %123 : vector<2x32xf32>
    %125 = arith.addf %121, %124 : vector<2x32xf32>
    %126 = vector.extract_strided_slice %109 {offsets = [0, 224], sizes = [2, 32], strides = [1, 1]} : vector<2x256xf32> to vector<2x32xf32>
    %127 = math.tanh %125 : vector<2x32xf32>
    %128 = arith.mulf %126, %127 : vector<2x32xf32>
    %129 = tpu.concatenate %119, %128 in 1 : vector<2x32xf32>, vector<2x32xf32> -> vector<2x64xf32>
    %cst_26 = arith.constant dense<0.000000e+00> : vector<2x256xf32>
    %130 = tpu.matmul %129, %7, %cst_26 {dimension_numbers = #tpu.dot_dimension_numbers<[1], [0], [0], [1], [0, 0, 1, 1], [], []>} : vector<2x64xf32>, vector<64x256xf32>, vector<2x256xf32> -> vector<2x256xf32>
    %c8_27 = arith.constant 8 : index
    %c0_28 = arith.constant 0 : index
    %131 = vector.load %arg7[%c8_27, %c0_28] : memref<16x256xf32, #tpu.memory_space<vmem>>, vector<2x128xf32>
    %c6_29 = arith.constant 6 : index
    %c128_30 = arith.constant 128 : index
    %132 = vector.load %arg7[%c6_29, %c128_30] : memref<16x256xf32, #tpu.memory_space<vmem>>, vector<2x128xf32>
    %133 = tpu.concatenate %131, %132 in 1 : vector<2x128xf32>, vector<2x128xf32> -> vector<2x256xf32>
    %134 = arith.addf %133, %130 : vector<2x256xf32>
    %135 = arith.negf %134 : vector<2x256xf32>
    %136 = math.exp %135 : vector<2x256xf32>
    %cst_31 = arith.constant 1.000000e+00 : f32
    %137 = vector.broadcast %cst_31 : f32 to vector<2x256xf32>
    %138 = arith.addf %137, %136 : vector<2x256xf32>
    %139 = arith.divf %137, %138 : vector<2x256xf32>
    %140 = math.tanh %134 : vector<2x256xf32>
    %141 = vector.extract_strided_slice %139 {offsets = [0, 32], sizes = [2, 32], strides = [1, 1]} : vector<2x256xf32> to vector<2x32xf32>
    %142 = arith.mulf %141, %116 : vector<2x32xf32>
    %143 = vector.extract_strided_slice %139 {offsets = [0, 0], sizes = [2, 32], strides = [1, 1]} : vector<2x256xf32> to vector<2x32xf32>
    %144 = vector.extract_strided_slice %140 {offsets = [0, 64], sizes = [2, 32], strides = [1, 1]} : vector<2x256xf32> to vector<2x32xf32>
    %145 = arith.mulf %143, %144 : vector<2x32xf32>
    %146 = arith.addf %142, %145 : vector<2x32xf32>
    %147 = vector.extract_strided_slice %139 {offsets = [0, 96], sizes = [2, 32], strides = [1, 1]} : vector<2x256xf32> to vector<2x32xf32>
    %148 = math.tanh %146 : vector<2x32xf32>
    %149 = arith.mulf %147, %148 : vector<2x32xf32>
    %150 = vector.extract_strided_slice %139 {offsets = [0, 160], sizes = [2, 32], strides = [1, 1]} : vector<2x256xf32> to vector<2x32xf32>
    %151 = arith.mulf %150, %125 : vector<2x32xf32>
    %152 = vector.extract_strided_slice %139 {offsets = [0, 128], sizes = [2, 32], strides = [1, 1]} : vector<2x256xf32> to vector<2x32xf32>
    %153 = vector.extract_strided_slice %140 {offsets = [0, 192], sizes = [2, 32], strides = [1, 1]} : vector<2x256xf32> to vector<2x32xf32>
    %154 = arith.mulf %152, %153 : vector<2x32xf32>
    %155 = arith.addf %151, %154 : vector<2x32xf32>
    %156 = vector.extract_strided_slice %139 {offsets = [0, 224], sizes = [2, 32], strides = [1, 1]} : vector<2x256xf32> to vector<2x32xf32>
    %157 = math.tanh %155 : vector<2x32xf32>
    %158 = arith.mulf %156, %157 : vector<2x32xf32>
    %159 = tpu.concatenate %149, %158 in 1 : vector<2x32xf32>, vector<2x32xf32> -> vector<2x64xf32>
    %cst_32 = arith.constant dense<0.000000e+00> : vector<2x256xf32>
    %160 = tpu.matmul %159, %7, %cst_32 {dimension_numbers = #tpu.dot_dimension_numbers<[1], [0], [0], [1], [0, 0, 1, 1], [], []>} : vector<2x64xf32>, vector<64x256xf32>, vector<2x256xf32> -> vector<2x256xf32>
    %c10_33 = arith.constant 10 : index
    %c0_34 = arith.constant 0 : index
    %161 = vector.load %arg7[%c10_33, %c0_34] : memref<16x256xf32, #tpu.memory_space<vmem>>, vector<2x128xf32>
    %c4_35 = arith.constant 4 : index
    %c128_36 = arith.constant 128 : index
    %162 = vector.load %arg7[%c4_35, %c128_36] : memref<16x256xf32, #tpu.memory_space<vmem>>, vector<2x128xf32>
    %163 = tpu.concatenate %161, %162 in 1 : vector<2x128xf32>, vector<2x128xf32> -> vector<2x256xf32>
    %164 = arith.addf %163, %160 : vector<2x256xf32>
    %165 = arith.negf %164 : vector<2x256xf32>
    %166 = math.exp %165 : vector<2x256xf32>
    %cst_37 = arith.constant 1.000000e+00 : f32
    %167 = vector.broadcast %cst_37 : f32 to vector<2x256xf32>
    %168 = arith.addf %167, %166 : vector<2x256xf32>
    %169 = arith.divf %167, %168 : vector<2x256xf32>
    %170 = math.tanh %164 : vector<2x256xf32>
    %171 = vector.extract_strided_slice %169 {offsets = [0, 32], sizes = [2, 32], strides = [1, 1]} : vector<2x256xf32> to vector<2x32xf32>
    %172 = arith.mulf %171, %146 : vector<2x32xf32>
    %173 = vector.extract_strided_slice %169 {offsets = [0, 0], sizes = [2, 32], strides = [1, 1]} : vector<2x256xf32> to vector<2x32xf32>
    %174 = vector.extract_strided_slice %170 {offsets = [0, 64], sizes = [2, 32], strides = [1, 1]} : vector<2x256xf32> to vector<2x32xf32>
    %175 = arith.mulf %173, %174 : vector<2x32xf32>
    %176 = arith.addf %172, %175 : vector<2x32xf32>
    %177 = vector.extract_strided_slice %169 {offsets = [0, 96], sizes = [2, 32], strides = [1, 1]} : vector<2x256xf32> to vector<2x32xf32>
    %178 = math.tanh %176 : vector<2x32xf32>
    %179 = arith.mulf %177, %178 : vector<2x32xf32>
    %180 = vector.extract_strided_slice %169 {offsets = [0, 160], sizes = [2, 32], strides = [1, 1]} : vector<2x256xf32> to vector<2x32xf32>
    %181 = arith.mulf %180, %155 : vector<2x32xf32>
    %182 = vector.extract_strided_slice %169 {offsets = [0, 128], sizes = [2, 32], strides = [1, 1]} : vector<2x256xf32> to vector<2x32xf32>
    %183 = vector.extract_strided_slice %170 {offsets = [0, 192], sizes = [2, 32], strides = [1, 1]} : vector<2x256xf32> to vector<2x32xf32>
    %184 = arith.mulf %182, %183 : vector<2x32xf32>
    %185 = arith.addf %181, %184 : vector<2x32xf32>
    %186 = vector.extract_strided_slice %169 {offsets = [0, 224], sizes = [2, 32], strides = [1, 1]} : vector<2x256xf32> to vector<2x32xf32>
    %187 = math.tanh %185 : vector<2x32xf32>
    %188 = arith.mulf %186, %187 : vector<2x32xf32>
    %189 = tpu.concatenate %179, %188 in 1 : vector<2x32xf32>, vector<2x32xf32> -> vector<2x64xf32>
    %cst_38 = arith.constant dense<0.000000e+00> : vector<2x256xf32>
    %190 = tpu.matmul %189, %7, %cst_38 {dimension_numbers = #tpu.dot_dimension_numbers<[1], [0], [0], [1], [0, 0, 1, 1], [], []>} : vector<2x64xf32>, vector<64x256xf32>, vector<2x256xf32> -> vector<2x256xf32>
    %c12_39 = arith.constant 12 : index
    %c0_40 = arith.constant 0 : index
    %191 = vector.load %arg7[%c12_39, %c0_40] : memref<16x256xf32, #tpu.memory_space<vmem>>, vector<2x128xf32>
    %c2_41 = arith.constant 2 : index
    %c128_42 = arith.constant 128 : index
    %192 = vector.load %arg7[%c2_41, %c128_42] : memref<16x256xf32, #tpu.memory_space<vmem>>, vector<2x128xf32>
    %193 = tpu.concatenate %191, %192 in 1 : vector<2x128xf32>, vector<2x128xf32> -> vector<2x256xf32>
    %194 = arith.addf %193, %190 : vector<2x256xf32>
    %195 = arith.negf %194 : vector<2x256xf32>
    %196 = math.exp %195 : vector<2x256xf32>
    %cst_43 = arith.constant 1.000000e+00 : f32
    %197 = vector.broadcast %cst_43 : f32 to vector<2x256xf32>
    %198 = arith.addf %197, %196 : vector<2x256xf32>
    %199 = arith.divf %197, %198 : vector<2x256xf32>
    %200 = math.tanh %194 : vector<2x256xf32>
    %201 = vector.extract_strided_slice %199 {offsets = [0, 32], sizes = [2, 32], strides = [1, 1]} : vector<2x256xf32> to vector<2x32xf32>
    %202 = arith.mulf %201, %176 : vector<2x32xf32>
    %203 = vector.extract_strided_slice %199 {offsets = [0, 0], sizes = [2, 32], strides = [1, 1]} : vector<2x256xf32> to vector<2x32xf32>
    %204 = vector.extract_strided_slice %200 {offsets = [0, 64], sizes = [2, 32], strides = [1, 1]} : vector<2x256xf32> to vector<2x32xf32>
    %205 = arith.mulf %203, %204 : vector<2x32xf32>
    %206 = arith.addf %202, %205 : vector<2x32xf32>
    %207 = vector.extract_strided_slice %199 {offsets = [0, 96], sizes = [2, 32], strides = [1, 1]} : vector<2x256xf32> to vector<2x32xf32>
    %208 = math.tanh %206 : vector<2x32xf32>
    %209 = arith.mulf %207, %208 : vector<2x32xf32>
    %210 = vector.extract_strided_slice %199 {offsets = [0, 160], sizes = [2, 32], strides = [1, 1]} : vector<2x256xf32> to vector<2x32xf32>
    %211 = arith.mulf %210, %185 : vector<2x32xf32>
    %212 = vector.extract_strided_slice %199 {offsets = [0, 128], sizes = [2, 32], strides = [1, 1]} : vector<2x256xf32> to vector<2x32xf32>
    %213 = vector.extract_strided_slice %200 {offsets = [0, 192], sizes = [2, 32], strides = [1, 1]} : vector<2x256xf32> to vector<2x32xf32>
    %214 = arith.mulf %212, %213 : vector<2x32xf32>
    %215 = arith.addf %211, %214 : vector<2x32xf32>
    %216 = vector.extract_strided_slice %199 {offsets = [0, 224], sizes = [2, 32], strides = [1, 1]} : vector<2x256xf32> to vector<2x32xf32>
    %217 = math.tanh %215 : vector<2x32xf32>
    %218 = arith.mulf %216, %217 : vector<2x32xf32>
    %219 = tpu.concatenate %209, %218 in 1 : vector<2x32xf32>, vector<2x32xf32> -> vector<2x64xf32>
    %cst_44 = arith.constant dense<0.000000e+00> : vector<2x256xf32>
    %220 = tpu.matmul %219, %7, %cst_44 {dimension_numbers = #tpu.dot_dimension_numbers<[1], [0], [0], [1], [0, 0, 1, 1], [], []>} : vector<2x64xf32>, vector<64x256xf32>, vector<2x256xf32> -> vector<2x256xf32>
    %c14_45 = arith.constant 14 : index
    %c0_46 = arith.constant 0 : index
    %221 = vector.load %arg7[%c14_45, %c0_46] : memref<16x256xf32, #tpu.memory_space<vmem>>, vector<2x128xf32>
    %c0_47 = arith.constant 0 : index
    %c128_48 = arith.constant 128 : index
    %222 = vector.load %arg7[%c0_47, %c128_48] : memref<16x256xf32, #tpu.memory_space<vmem>>, vector<2x128xf32>
    %223 = tpu.concatenate %221, %222 in 1 : vector<2x128xf32>, vector<2x128xf32> -> vector<2x256xf32>
    %224 = arith.addf %223, %220 : vector<2x256xf32>
    %225 = arith.negf %224 : vector<2x256xf32>
    %226 = math.exp %225 : vector<2x256xf32>
    %cst_49 = arith.constant 1.000000e+00 : f32
    %227 = vector.broadcast %cst_49 : f32 to vector<2x256xf32>
    %228 = arith.addf %227, %226 : vector<2x256xf32>
    %229 = arith.divf %227, %228 : vector<2x256xf32>
    %230 = math.tanh %224 : vector<2x256xf32>
    %231 = vector.extract_strided_slice %229 {offsets = [0, 32], sizes = [2, 32], strides = [1, 1]} : vector<2x256xf32> to vector<2x32xf32>
    %232 = arith.mulf %231, %206 : vector<2x32xf32>
    %233 = vector.extract_strided_slice %229 {offsets = [0, 0], sizes = [2, 32], strides = [1, 1]} : vector<2x256xf32> to vector<2x32xf32>
    %234 = vector.extract_strided_slice %230 {offsets = [0, 64], sizes = [2, 32], strides = [1, 1]} : vector<2x256xf32> to vector<2x32xf32>
    %235 = arith.mulf %233, %234 : vector<2x32xf32>
    %236 = arith.addf %232, %235 : vector<2x32xf32>
    %237 = vector.extract_strided_slice %229 {offsets = [0, 96], sizes = [2, 32], strides = [1, 1]} : vector<2x256xf32> to vector<2x32xf32>
    %238 = math.tanh %236 : vector<2x32xf32>
    %239 = arith.mulf %237, %238 : vector<2x32xf32>
    %240 = vector.extract_strided_slice %229 {offsets = [0, 160], sizes = [2, 32], strides = [1, 1]} : vector<2x256xf32> to vector<2x32xf32>
    %241 = arith.mulf %240, %215 : vector<2x32xf32>
    %242 = vector.extract_strided_slice %229 {offsets = [0, 128], sizes = [2, 32], strides = [1, 1]} : vector<2x256xf32> to vector<2x32xf32>
    %243 = vector.extract_strided_slice %230 {offsets = [0, 192], sizes = [2, 32], strides = [1, 1]} : vector<2x256xf32> to vector<2x32xf32>
    %244 = arith.mulf %242, %243 : vector<2x32xf32>
    %245 = arith.addf %241, %244 : vector<2x32xf32>
    %246 = vector.extract_strided_slice %229 {offsets = [0, 224], sizes = [2, 32], strides = [1, 1]} : vector<2x256xf32> to vector<2x32xf32>
    %247 = math.tanh %245 : vector<2x32xf32>
    %248 = arith.mulf %246, %247 : vector<2x32xf32>
    %249 = tpu.concatenate %239, %248 in 1 : vector<2x32xf32>, vector<2x32xf32> -> vector<2x64xf32>
    %250 = tpu.concatenate %29, %248 in 1 : vector<2x32xf32>, vector<2x32xf32> -> vector<2x64xf32>
    %251 = tpu.concatenate %59, %218 in 1 : vector<2x32xf32>, vector<2x32xf32> -> vector<2x64xf32>
    %252 = tpu.concatenate %89, %188 in 1 : vector<2x32xf32>, vector<2x32xf32> -> vector<2x64xf32>
    %253 = tpu.concatenate %119, %158 in 1 : vector<2x32xf32>, vector<2x32xf32> -> vector<2x64xf32>
    %254 = tpu.concatenate %149, %128 in 1 : vector<2x32xf32>, vector<2x32xf32> -> vector<2x64xf32>
    %255 = tpu.concatenate %179, %98 in 1 : vector<2x32xf32>, vector<2x32xf32> -> vector<2x64xf32>
    %256 = tpu.concatenate %209, %68 in 1 : vector<2x32xf32>, vector<2x32xf32> -> vector<2x64xf32>
    %257 = tpu.concatenate %239, %38 in 1 : vector<2x32xf32>, vector<2x32xf32> -> vector<2x64xf32>
    %258 = arith.mulf %250, %249 : vector<2x64xf32>
    %cst_50 = arith.constant dense<0.000000e+00> : vector<2xf32>
    %259 = vector.multi_reduction <add>, %258, %cst_50 [1] : vector<2x64xf32> to vector<2xf32>
    %260 = vector.shape_cast %259 : vector<2xf32> to vector<2x1xf32>
    %261 = arith.mulf %251, %249 : vector<2x64xf32>
    %cst_51 = arith.constant dense<0.000000e+00> : vector<2xf32>
    %262 = vector.multi_reduction <add>, %261, %cst_51 [1] : vector<2x64xf32> to vector<2xf32>
    %263 = vector.shape_cast %262 : vector<2xf32> to vector<2x1xf32>
    %264 = arith.mulf %252, %249 : vector<2x64xf32>
    %cst_52 = arith.constant dense<0.000000e+00> : vector<2xf32>
    %265 = vector.multi_reduction <add>, %264, %cst_52 [1] : vector<2x64xf32> to vector<2xf32>
    %266 = vector.shape_cast %265 : vector<2xf32> to vector<2x1xf32>
    %267 = arith.mulf %253, %249 : vector<2x64xf32>
    %cst_53 = arith.constant dense<0.000000e+00> : vector<2xf32>
    %268 = vector.multi_reduction <add>, %267, %cst_53 [1] : vector<2x64xf32> to vector<2xf32>
    %269 = vector.shape_cast %268 : vector<2xf32> to vector<2x1xf32>
    %270 = arith.mulf %254, %249 : vector<2x64xf32>
    %cst_54 = arith.constant dense<0.000000e+00> : vector<2xf32>
    %271 = vector.multi_reduction <add>, %270, %cst_54 [1] : vector<2x64xf32> to vector<2xf32>
    %272 = vector.shape_cast %271 : vector<2xf32> to vector<2x1xf32>
    %273 = arith.mulf %255, %249 : vector<2x64xf32>
    %cst_55 = arith.constant dense<0.000000e+00> : vector<2xf32>
    %274 = vector.multi_reduction <add>, %273, %cst_55 [1] : vector<2x64xf32> to vector<2xf32>
    %275 = vector.shape_cast %274 : vector<2xf32> to vector<2x1xf32>
    %276 = arith.mulf %256, %249 : vector<2x64xf32>
    %cst_56 = arith.constant dense<0.000000e+00> : vector<2xf32>
    %277 = vector.multi_reduction <add>, %276, %cst_56 [1] : vector<2x64xf32> to vector<2xf32>
    %278 = vector.shape_cast %277 : vector<2xf32> to vector<2x1xf32>
    %279 = arith.mulf %257, %249 : vector<2x64xf32>
    %cst_57 = arith.constant dense<0.000000e+00> : vector<2xf32>
    %280 = vector.multi_reduction <add>, %279, %cst_57 [1] : vector<2x64xf32> to vector<2xf32>
    %281 = vector.shape_cast %280 : vector<2xf32> to vector<2x1xf32>
    %282 = tpu.concatenate %260, %263, %266, %269, %272, %275, %278, %281 in 1 : vector<2x1xf32>, vector<2x1xf32>, vector<2x1xf32>, vector<2x1xf32>, vector<2x1xf32>, vector<2x1xf32>, vector<2x1xf32>, vector<2x1xf32> -> vector<2x8xf32>
    %cst_58 = arith.constant dense<0xFF800000> : vector<2xf32>
    %283 = vector.multi_reduction <maximumf>, %282, %cst_58 [1] : vector<2x8xf32> to vector<2xf32>
    %284 = vector.shape_cast %283 : vector<2xf32> to vector<2x1xf32>
    %285 = vector.broadcast %284 : vector<2x1xf32> to vector<2x8xf32>
    %286 = arith.subf %282, %285 : vector<2x8xf32>
    %287 = math.exp %286 : vector<2x8xf32>
    %cst_59 = arith.constant dense<0.000000e+00> : vector<2xf32>
    %288 = vector.multi_reduction <add>, %287, %cst_59 [1] : vector<2x8xf32> to vector<2xf32>
    %289 = vector.shape_cast %288 : vector<2xf32> to vector<2x1xf32>
    %290 = vector.broadcast %289 : vector<2x1xf32> to vector<2x8xf32>
    %291 = arith.divf %287, %290 : vector<2x8xf32>
    %292 = vector.extract_strided_slice %291 {offsets = [0, 0], sizes = [2, 1], strides = [1, 1]} : vector<2x8xf32> to vector<2x1xf32>
    %293 = vector.broadcast %292 : vector<2x1xf32> to vector<2x64xf32>
    %294 = arith.mulf %250, %293 : vector<2x64xf32>
    %295 = vector.extract_strided_slice %291 {offsets = [0, 1], sizes = [2, 1], strides = [1, 1]} : vector<2x8xf32> to vector<2x1xf32>
    %296 = vector.broadcast %295 : vector<2x1xf32> to vector<2x64xf32>
    %297 = arith.mulf %251, %296 : vector<2x64xf32>
    %298 = arith.addf %294, %297 : vector<2x64xf32>
    %299 = vector.extract_strided_slice %291 {offsets = [0, 2], sizes = [2, 1], strides = [1, 1]} : vector<2x8xf32> to vector<2x1xf32>
    %300 = vector.broadcast %299 : vector<2x1xf32> to vector<2x64xf32>
    %301 = arith.mulf %252, %300 : vector<2x64xf32>
    %302 = arith.addf %298, %301 : vector<2x64xf32>
    %303 = vector.extract_strided_slice %291 {offsets = [0, 3], sizes = [2, 1], strides = [1, 1]} : vector<2x8xf32> to vector<2x1xf32>
    %304 = vector.broadcast %303 : vector<2x1xf32> to vector<2x64xf32>
    %305 = arith.mulf %253, %304 : vector<2x64xf32>
    %306 = arith.addf %302, %305 : vector<2x64xf32>
    %307 = vector.extract_strided_slice %291 {offsets = [0, 4], sizes = [2, 1], strides = [1, 1]} : vector<2x8xf32> to vector<2x1xf32>
    %308 = vector.broadcast %307 : vector<2x1xf32> to vector<2x64xf32>
    %309 = arith.mulf %254, %308 : vector<2x64xf32>
    %310 = arith.addf %306, %309 : vector<2x64xf32>
    %311 = vector.extract_strided_slice %291 {offsets = [0, 5], sizes = [2, 1], strides = [1, 1]} : vector<2x8xf32> to vector<2x1xf32>
    %312 = vector.broadcast %311 : vector<2x1xf32> to vector<2x64xf32>
    %313 = arith.mulf %255, %312 : vector<2x64xf32>
    %314 = arith.addf %310, %313 : vector<2x64xf32>
    %315 = vector.extract_strided_slice %291 {offsets = [0, 6], sizes = [2, 1], strides = [1, 1]} : vector<2x8xf32> to vector<2x1xf32>
    %316 = vector.broadcast %315 : vector<2x1xf32> to vector<2x64xf32>
    %317 = arith.mulf %256, %316 : vector<2x64xf32>
    %318 = arith.addf %314, %317 : vector<2x64xf32>
    %319 = vector.extract_strided_slice %291 {offsets = [0, 7], sizes = [2, 1], strides = [1, 1]} : vector<2x8xf32> to vector<2x1xf32>
    %320 = vector.broadcast %319 : vector<2x1xf32> to vector<2x64xf32>
    %321 = arith.mulf %257, %320 : vector<2x64xf32>
    %322 = arith.addf %318, %321 : vector<2x64xf32>
    %c0_60 = arith.constant 0 : index
    %c0_61 = arith.constant 0 : index
    %323 = vector.load %arg4[%c0_60, %c0_61] : memref<128x4xf32, #tpu.memory_space<vmem>>, vector<64x4xf32>
    %cst_62 = arith.constant dense<0.000000e+00> : vector<2x4xf32>
    %324 = tpu.matmul %249, %323, %cst_62 {dimension_numbers = #tpu.dot_dimension_numbers<[1], [0], [0], [1], [0, 0, 1, 1], [], []>} : vector<2x64xf32>, vector<64x4xf32>, vector<2x4xf32> -> vector<2x4xf32>
    %c64 = arith.constant 64 : index
    %c0_63 = arith.constant 0 : index
    %325 = vector.load %arg4[%c64, %c0_63] : memref<128x4xf32, #tpu.memory_space<vmem>>, vector<64x4xf32>
    %cst_64 = arith.constant dense<0.000000e+00> : vector<2x4xf32>
    %326 = tpu.matmul %322, %325, %cst_64 {dimension_numbers = #tpu.dot_dimension_numbers<[1], [0], [0], [1], [0, 0, 1, 1], [], []>} : vector<2x64xf32>, vector<64x4xf32>, vector<2x4xf32> -> vector<2x4xf32>
    %327 = arith.addf %324, %326 : vector<2x4xf32>
    %c0_65 = arith.constant 0 : index
    %c0_66 = arith.constant 0 : index
    %328 = vector.load %arg5[%c0_65, %c0_66] : memref<1x4xf32, #tpu.memory_space<vmem>>, vector<1x4xf32>
    %329 = vector.broadcast %328 : vector<1x4xf32> to vector<2x4xf32>
    %330 = arith.addf %327, %329 : vector<2x4xf32>
    %cst_67 = arith.constant dense<0xFF800000> : vector<2xf32>
    %331 = vector.multi_reduction <maximumf>, %330, %cst_67 [1] : vector<2x4xf32> to vector<2xf32>
    %332 = vector.shape_cast %331 : vector<2xf32> to vector<2x1xf32>
    %333 = vector.broadcast %332 : vector<2x1xf32> to vector<2x4xf32>
    %334 = arith.subf %330, %333 : vector<2x4xf32>
    %335 = math.exp %334 : vector<2x4xf32>
    %cst_68 = arith.constant dense<0.000000e+00> : vector<2xf32>
    %336 = vector.multi_reduction <add>, %335, %cst_68 [1] : vector<2x4xf32> to vector<2xf32>
    %337 = vector.shape_cast %336 : vector<2xf32> to vector<2x1xf32>
    %338 = vector.broadcast %337 : vector<2x1xf32> to vector<2x4xf32>
    %339 = arith.divf %335, %338 : vector<2x4xf32>
    %c0_69 = arith.constant 0 : index
    %c0_70 = arith.constant 0 : index
    %340 = vector.load %arg6[%c0_69, %c0_70] : memref<2x4xf32, #tpu.memory_space<vmem>>, vector<2x4xf32>
    tpu.vector_store %arg6[%c0_69, %c0_70], %339 {strides = array<i32>} : memref<2x4xf32, #tpu.memory_space<vmem>>, vector<2x4xf32>,
    return
  }
}

</mosaic_0001>

<llo_original>
// kernel: seq2seq_attention_forward.1
$region0: #{seq2seq_attention_forward.1}
  #allocation0 [shape = 'u32[]', space=smem, size = 0x4, offset = 0x4, fixed_abs, tag = 'smem constant byte address 0x4 - core index']
  #allocation1 [shape = 'u32[72,128]{1,0:T(1,128)}', space=vmem, size = 0x9000, scoped, tag = 'internal scratch']
  #allocation2 [shape = 'f32[16,256]{1,0:T(8,128)}', space=vmem, size = 0x4000, scoped, tag = 'scratch operand']
  %s0 = inlined_call_operand.vmem [shape: f32[16,32], index: 0, kind: input, shape index: {}]
  %s1 = inlined_call_operand.vmem [shape: f32[32,256], index: 1, kind: input, shape index: {}]
  %s2 = inlined_call_operand.vmem [shape: f32[1,256], index: 2, kind: input, shape index: {}]
  %s3 = inlined_call_operand.vmem [shape: f32[64,256], index: 3, kind: input, shape index: {}]
  %s4 = inlined_call_operand.vmem [shape: f32[128,4], index: 4, kind: input, shape index: {}]
  %s5 = inlined_call_operand.vmem [shape: f32[1,4], index: 5, kind: input, shape index: {}]
  %s6 = inlined_call_operand.hbm [shape: f32[2,4], index: 6, kind: output, shape index: {}]
  %s7 = sld [smem:[#allocation0]]
  $region34: #{seq2seq_attention_forward.1} parent=0
    _
  %s9 = ssub.s32 1, %s7
  %s10 = scalar_select 0, %s9, %s7
  $region1: #{seq2seq_attention_forward.1} parent=0
    #allocation3 [shape = 'u8[1024]{0}', space=vmem, size = 0x400, scoped, tag = 'output window, operand 0, single buffered']
    #allocation4 [shape = 's32[1]{0}', space=sflag, size = 0x4, scoped, tag = 'scoped memory for seq2seq_attention_forward.1']
    %11 = vsyncpa [#allocation4], 0
    // Predicated region
    $region2: #{seq2seq_attention_forward.1} parent=1 // pred_check
      _
    $region3: #{seq2seq_attention_forward.1} parent=1 // pred_check_branch
      %13 = sbr.rel (0) target = $region5
    $region4: #{seq2seq_attention_forward.1} parent=1 // pred_region
      _
    $region5: #{seq2seq_attention_forward.1} parent=1 // pred_fallthru
      _
    // Predicated region
    $region6: #{seq2seq_attention_forward.1} parent=1 // pred_check
      _
    $region7: #{seq2seq_attention_forward.1} parent=1 // pred_check_branch
      %15 = sbr.rel (0) target = $region9
    $region8: #{seq2seq_attention_forward.1} parent=1 // pred_region
      _
    $region9: #{seq2seq_attention_forward.1} parent=1 // pred_fallthru
      _
    // Predicated region
    $region10: #{seq2seq_attention_forward.1} parent=1 // pred_check
      _
    $region11: #{seq2seq_attention_forward.1} parent=1 // pred_check_branch
      %17 = sbr.rel (0) target = $region13
    $region12: #{seq2seq_attention_forward.1} parent=1 // pred_region
      _
    $region13: #{seq2seq_attention_forward.1} parent=1 // pred_fallthru
      _
    // Predicated region
    $region14: #{seq2seq_attention_forward.1} parent=1 // pred_check
      _
    $region15: #{seq2seq_attention_forward.1} parent=1 // pred_check_branch
      %19 = sbr.rel (0) target = $region17
    $region16: #{seq2seq_attention_forward.1} parent=1 // pred_region
      _
    $region17: #{seq2seq_attention_forward.1} parent=1 // pred_fallthru
      _
    // Predicated region
    $region18: #{seq2seq_attention_forward.1} parent=1 // pred_check
      _
    $region19: #{seq2seq_attention_forward.1} parent=1 // pred_check_branch
      %21 = sbr.rel (0) target = $region21
    $region20: #{seq2seq_attention_forward.1} parent=1 // pred_region
      _
    $region21: #{seq2seq_attention_forward.1} parent=1 // pred_fallthru
      _
    // Predicated region
    $region22: #{seq2seq_attention_forward.1} parent=1 // pred_check
      _
    $region23: #{seq2seq_attention_forward.1} parent=1 // pred_check_branch
      %23 = sbr.rel (0) target = $region25
    $region24: #{seq2seq_attention_forward.1} parent=1 // pred_region
      _
    $region25: #{seq2seq_attention_forward.1} parent=1 // pred_fallthru
      _
    %v24 = vld [vmem:[%s0] sm:$0xff]
    %v25 = vld [vmem:[%s0 + $0x8] sm:$0xff]
    %v26 = vld [vmem:[%s1] sm:$0xff]
    %v27 = vld [vmem:[%s1 + $0x8] sm:$0xff]
    %v28 = vld [vmem:[%s1 + $0x10] sm:$0xff]
    %v29 = vld [vmem:[%s1 + $0x18] sm:$0xff]
    %v30 = vld [vmem:[%s1 + $0x20] sm:$0xff]
    %v31 = vld [vmem:[%s1 + $0x28] sm:$0xff]
    %v32 = vld [vmem:[%s1 + $0x30] sm:$0xff]
    %v33 = vld [vmem:[%s1 + $0x38] sm:$0xff]
    %v34 = vld [vmem:[%s2] sm:$0x3]
    %v36 = vperm.slane %v34, 0
    %v37 = vperm.slane %v34, 1
    %vm40 = vcmask 261120
    %v42 = vsel %vm40, %v24, 0
    %v45 = vsel %vm40, %v25, 0
    %47 = vmatpush.msra.mxu0 0.0
    %48 = vmatpush.msra.mxu0 0.0
    %49 = vmatpush.msra.mxu0 0.0
    %50 = vmatpush.msra.mxu0 0.0
    %51 = vmatpush.msra.mxu0 0.0
    %52 = vmatpush.msra.mxu0 0.0
    %53 = vmatpush.msra.mxu0 0.0
    %54 = vmatpush.msra.mxu0 0.0
    %55 = vmatpush.msra.mxu0 0.0
    %56 = vmatpush.msra.mxu0 0.0
    %57 = vmatpush.msra.mxu0 0.0
    %58 = vmatpush.msra.mxu0 0.0
    %59 = vmatpush.msra.mxu0 %v32
    %60 = vmatpush.msra.mxu0 %v30
    %61 = vmatpush.msra.mxu0 %v28
    %62 = vmatpush.msra.mxu0 %v26
    %63 = vmatmul.f32.gmra.mxu0 %v42
    %v64 = vpop.f32.mrf.mxu0
    %v65 = vadd.f32 %v36, %v64
    %66 = vmatmul.f32.gmra.mxu0 %v45
    %v67 = vpop.f32.mrf.mxu0
    %v68 = vadd.f32 %v36, %v67
    %69 = vdwg.mxu0
    %70 = vmatpush.msra.mxu0 0.0
    %71 = vmatpush.msra.mxu0 0.0
    %72 = vmatpush.msra.mxu0 0.0
    %73 = vmatpush.msra.mxu0 0.0
    %74 = vmatpush.msra.mxu0 0.0
    %75 = vmatpush.msra.mxu0 0.0
    %76 = vmatpush.msra.mxu0 0.0
    %77 = vmatpush.msra.mxu0 0.0
    %78 = vmatpush.msra.mxu0 0.0
    %79 = vmatpush.msra.mxu0 0.0
    %80 = vmatpush.msra.mxu0 0.0
    %81 = vmatpush.msra.mxu0 0.0
    %82 = vmatpush.msra.mxu0 %v33
    %83 = vmatpush.msra.mxu0 %v31
    %84 = vmatpush.msra.mxu0 %v29
    %85 = vmatpush.msra.mxu0 %v27
    %86 = vmatmul.f32.gmra.mxu0 %v42
    %v87 = vpop.f32.mrf.mxu0
    %v88 = vadd.f32 %v37, %v87
    %89 = vmatmul.f32.gmra.mxu0 %v45
    %v90 = vpop.f32.mrf.mxu0
    %v91 = vadd.f32 %v37, %v90
    %92 = vdwg.mxu0
    %93 = vst [vmem:[#allocation2] sm:$0xff] %v65
    %94 = vst [vmem:[#allocation2 + $0x8] sm:$0xff] %v88
    %95 = vst [vmem:[#allocation2 + $0x10] sm:$0xff] %v68
    %96 = vst [vmem:[#allocation2 + $0x18] sm:$0xff] %v91
    %v97 = vld [vmem:[%s3] sm:$0xff]
    %v98 = vld [vmem:[%s3 + $0x8] sm:$0xff]
    %v99 = vld [vmem:[%s3 + $0x10] sm:$0xff]
    %v100 = vld [vmem:[%s3 + $0x18] sm:$0xff]
    %v101 = vld [vmem:[%s3 + $0x20] sm:$0xff]
    %v102 = vld [vmem:[%s3 + $0x28] sm:$0xff]
    %v103 = vld [vmem:[%s3 + $0x30] sm:$0xff]
    %v104 = vld [vmem:[%s3 + $0x38] sm:$0xff]
    %v105 = vld [vmem:[%s3 + $0x40] sm:$0xff]
    %v106 = vld [vmem:[%s3 + $0x48] sm:$0xff]
    %v107 = vld [vmem:[%s3 + $0x50] sm:$0xff]
    %v108 = vld [vmem:[%s3 + $0x58] sm:$0xff]
    %v109 = vld [vmem:[%s3 + $0x60] sm:$0xff]
    %v110 = vld [vmem:[%s3 + $0x68] sm:$0xff]
    %v111 = vld [vmem:[%s3 + $0x70] sm:$0xff]
    %v112 = vld [vmem:[%s3 + $0x78] sm:$0xff]
    %vm113 = vcmask 523264
    %v115 = vsel %vm113, 0.0, 0
    %117 = vmatpush.msra.mxu0 0.0
    %118 = vmatpush.msra.mxu0 0.0
    %119 = vmatpush.msra.mxu0 0.0
    %120 = vmatpush.msra.mxu0 0.0
    %121 = vmatpush.msra.mxu0 0.0
    %122 = vmatpush.msra.mxu0 0.0
    %123 = vmatpush.msra.mxu0 0.0
    %124 = vmatpush.msra.mxu0 0.0
    %125 = vmatpush.msra.mxu0 %v111
    %126 = vmatpush.msra.mxu0 %v109
    %127 = vmatpush.msra.mxu0 %v107
    %128 = vmatpush.msra.mxu0 %v105
    %129 = vmatpush.msra.mxu0 %v103
    %130 = vmatpush.msra.mxu0 %v101
    %131 = vmatpush.msra.mxu0 %v99
    %132 = vmatpush.msra.mxu0 %v97
    %133 = vmatmul.f32.gmra.mxu0 %v115
    %v134 = vpop.f32.mrf.mxu0
    %v135 = vadd.f32 0.0, %v134
    %136 = vdwg.mxu0
    %137 = vmatpush.msra.mxu0 0.0
    %138 = vmatpush.msra.mxu0 0.0
    %139 = vmatpush.msra.mxu0 0.0
    %140 = vmatpush.msra.mxu0 0.0
    %141 = vmatpush.msra.mxu0 0.0
    %142 = vmatpush.msra.mxu0 0.0
    %143 = vmatpush.msra.mxu0 0.0
    %144 = vmatpush.msra.mxu0 0.0
    %145 = vmatpush.msra.mxu0 %v112
    %146 = vmatpush.msra.mxu0 %v110
    %147 = vmatpush.msra.mxu0 %v108
    %148 = vmatpush.msra.mxu0 %v106
    %149 = vmatpush.msra.mxu0 %v104
    %150 = vmatpush.msra.mxu0 %v102
    %151 = vmatpush.msra.mxu0 %v100
    %152 = vmatpush.msra.mxu0 %v98
    %153 = vmatmul.f32.gmra.mxu0 %v115
    %v154 = vpop.f32.mrf.mxu0
    %v155 = vadd.f32 0.0, %v154
    %156 = vdwg.mxu0
    %v157 = vld [vmem:[#allocation2] sm:$0x3]
    %v158 = vld [vmem:[#allocation2 + $0x18] sm:$0xc0]
    %v160 = vrot.slane %v158, 6
    %v162 = vadd.f32 %v157, %v135
    %v163 = vadd.f32 %v160, %v155
    %v164 = vxor.u32 %v162, 2147483648
    %v165 = vxor.u32 %v163, 2147483648
    %v166 = vmul.f32 %v164, 1.442695
    %v167 = vpow.pop %v166
    %v168 = vmul.f32 %v165, 1.442695
    %v169 = vpow.pop %v168
    %v170 = vadd.f32 %v167, 1.0
    %v171 = vadd.f32 %v169, 1.0
    %v172 = vrcp.pop %v170
    %v173 = vmul.f32 %v170, %v172
    %v174 = vsub.f32 1.0, %v173
    %v175 = vmul.f32 %v172, %v174
    %v176 = vadd.f32 %v172, %v175
    %vm177 = vweird.f32 %v170
    %vm178 = vweird.f32 %v172
    %vm179 = vmor %vm177, %vm178
    %v180 = vsel %vm179, %v172, %v176
    %v181 = vand.u32 2147483647, %v170
    %vm182 = vcmp.eq.f32.partialorder %v181, 8.507059e+37
    %v183 = vand.u32 %v170, 2147483648
    %v184 = vor.u32 1.1754944e-38, %v183
    %v185 = vsel %vm182, %v184, %v180
    %v186 = vmul.f32 1.0, %v185
    %v187 = vrcp.pop %v171
    %v188 = vmul.f32 %v171, %v187
    %v189 = vsub.f32 1.0, %v188
    %v190 = vmul.f32 %v187, %v189
    %v191 = vadd.f32 %v187, %v190
    %vm192 = vweird.f32 %v171
    %vm193 = vweird.f32 %v187
    %vm194 = vmor %vm192, %vm193
    %v195 = vsel %vm194, %v187, %v191
    %v196 = vand.u32 2147483647, %v171
    %vm197 = vcmp.eq.f32.partialorder %v196, 8.507059e+37
    %v198 = vand.u32 %v171, 2147483648
    %v199 = vor.u32 1.1754944e-38, %v198
    %v200 = vsel %vm197, %v199, %v195
    %v201 = vmul.f32 1.0, %v200
    %v202 = vtanh.pop %v162
    %v203 = vtanh.pop %v163
    %v204 = vmul.f32 %v186, 0.0
    %206 = vrot.lane.b32.xlu0 %v202, 64
    %v207 = vpop.permute.xlu0 %206
    %v209 = vmul.f32 %v186, %v207
    %211 = vrot.lane.b32.xlu0 %v209, 32
    %v212 = vpop.permute.xlu0 %211
    %v214 = vadd.f32 %v204, %v212
    %v215 = vtanh.pop %v214
    %217 = vrot.lane.b32.xlu0 %v215, 64
    %v218 = vpop.permute.xlu0 %217
    %v220 = vmul.f32 %v186, %v218
    %v221 = vmul.f32 %v201, 0.0
    %223 = vrot.lane.b32.xlu0 %v203, 64
    %v224 = vpop.permute.xlu0 %223
    %v226 = vmul.f32 %v201, %v224
    %228 = vrot.lane.b32.xlu0 %v226, 32
    %v229 = vpop.permute.xlu0 %228
    %v231 = vadd.f32 %v221, %v229
    %v232 = vtanh.pop %v231
    %234 = vrot.lane.b32.xlu0 %v232, 64
    %v235 = vpop.permute.xlu0 %234
    %v237 = vmul.f32 %v201, %v235
    %239 = vrot.lane.b32.xlu0 %v220, 32
    %v240 = vpop.permute.xlu0 %239
    %243 = vrot.lane.b32.xlu0 %v237, 64
    %v244 = vpop.permute.xlu0 %243
    %v246 = vsel %vm40, %v240, %v244
    %v248 = vsel %vm113, %v246, 0
    %250 = vmatpush.msra.mxu0 0.0
    %251 = vmatpush.msra.mxu0 0.0
    %252 = vmatpush.msra.mxu0 0.0
    %253 = vmatpush.msra.mxu0 0.0
    %254 = vmatpush.msra.mxu0 0.0
    %255 = vmatpush.msra.mxu0 0.0
    %256 = vmatpush.msra.mxu0 0.0
    %257 = vmatpush.msra.mxu0 0.0
    %258 = vmatpush.msra.mxu0 %v111
    %259 = vmatpush.msra.mxu0 %v109
    %260 = vmatpush.msra.mxu0 %v107
    %261 = vmatpush.msra.mxu0 %v105
    %262 = vmatpush.msra.mxu0 %v103
    %263 = vmatpush.msra.mxu0 %v101
    %264 = vmatpush.msra.mxu0 %v99
    %265 = vmatpush.msra.mxu0 %v97
    %266 = vmatmul.f32.gmra.mxu0 %v248
    %v267 = vpop.f32.mrf.mxu0
    %v268 = vadd.f32 0.0, %v267
    %269 = vdwg.mxu0
    %270 = vmatpush.msra.mxu0 0.0
    %271 = vmatpush.msra.mxu0 0.0
    %272 = vmatpush.msra.mxu0 0.0
    %273 = vmatpush.msra.mxu0 0.0
    %274 = vmatpush.msra.mxu0 0.0
    %275 = vmatpush.msra.mxu0 0.0
    %276 = vmatpush.msra.mxu0 0.0
    %277 = vmatpush.msra.mxu0 0.0
    %278 = vmatpush.msra.mxu0 %v112
    %279 = vmatpush.msra.mxu0 %v110
    %280 = vmatpush.msra.mxu0 %v108
    %281 = vmatpush.msra.mxu0 %v106
    %282 = vmatpush.msra.mxu0 %v104
    %283 = vmatpush.msra.mxu0 %v102
    %284 = vmatpush.msra.mxu0 %v100
    %285 = vmatpush.msra.mxu0 %v98
    %286 = vmatmul.f32.gmra.mxu0 %v248
    %v287 = vpop.f32.mrf.mxu0
    %v288 = vadd.f32 0.0, %v287
    %289 = vdwg.mxu0
    %v290 = vld [vmem:[#allocation2] sm:$0xc]
    %v291 = vld [vmem:[#allocation2 + $0x18] sm:$0x30]
    %v293 = vrot.slane %v291, 2
    %v297 = vrot.slane %v268, 6
    %v298 = vrot.slane %v288, 6
    %v301 = vadd.f32 %v290, %v297
    %v302 = vadd.f32 %v293, %v298
    %v303 = vxor.u32 %v301, 2147483648
    %v304 = vxor.u32 %v302, 2147483648
    %v305 = vmul.f32 %v303, 1.442695
    %v306 = vpow.pop %v305
    %v307 = vmul.f32 %v304, 1.442695
    %v308 = vpow.pop %v307
    %v309 = vadd.f32 %v306, 1.0
    %v310 = vadd.f32 %v308, 1.0
    %v311 = vrcp.pop %v309
    %v312 = vmul.f32 %v309, %v311
    %v313 = vsub.f32 1.0, %v312
    %v314 = vmul.f32 %v311, %v313
    %v315 = vadd.f32 %v311, %v314
    %vm316 = vweird.f32 %v309
    %vm317 = vweird.f32 %v311
    %vm318 = vmor %vm316, %vm317
    %v319 = vsel %vm318, %v311, %v315
    %v320 = vand.u32 2147483647, %v309
    %vm321 = vcmp.eq.f32.partialorder %v320, 8.507059e+37
    %v322 = vand.u32 %v309, 2147483648
    %v323 = vor.u32 1.1754944e-38, %v322
    %v324 = vsel %vm321, %v323, %v319
    %v325 = vmul.f32 1.0, %v324
    %v326 = vrcp.pop %v310
    %v327 = vmul.f32 %v310, %v326
    %v328 = vsub.f32 1.0, %v327
    %v329 = vmul.f32 %v326, %v328
    %v330 = vadd.f32 %v326, %v329
    %vm331 = vweird.f32 %v310
    %vm332 = vweird.f32 %v326
    %vm333 = vmor %vm331, %vm332
    %v334 = vsel %vm333, %v326, %v330
    %v335 = vand.u32 2147483647, %v310
    %vm336 = vcmp.eq.f32.partialorder %v335, 8.507059e+37
    %v337 = vand.u32 %v310, 2147483648
    %v338 = vor.u32 1.1754944e-38, %v337
    %v339 = vsel %vm336, %v338, %v334
    %v340 = vmul.f32 1.0, %v339
    %v341 = vtanh.pop %v301
    %v342 = vtanh.pop %v302
    %v344 = vrot.slane %v214, 6
    %v346 = vmul.f32 %v325, %v344
    %348 = vrot.lane.b32.xlu0 %v341, 64
    %v349 = vpop.permute.xlu0 %348
    %v351 = vmul.f32 %v325, %v349
    %353 = vrot.lane.b32.xlu0 %v351, 32
    %v354 = vpop.permute.xlu0 %353
    %v356 = vadd.f32 %v346, %v354
    %v357 = vtanh.pop %v356
    %359 = vrot.lane.b32.xlu0 %v357, 64
    %v360 = vpop.permute.xlu0 %359
    %v362 = vmul.f32 %v325, %v360
    %v364 = vrot.slane %v231, 6
    %v366 = vmul.f32 %v340, %v364
    %368 = vrot.lane.b32.xlu0 %v342, 64
    %v369 = vpop.permute.xlu0 %368
    %v371 = vmul.f32 %v340, %v369
    %373 = vrot.lane.b32.xlu0 %v371, 32
    %v374 = vpop.permute.xlu0 %373
    %v376 = vadd.f32 %v366, %v374
    %v377 = vtanh.pop %v376
    %379 = vrot.lane.b32.xlu0 %v377, 64
    %v380 = vpop.permute.xlu0 %379
    %v382 = vmul.f32 %v340, %v380
    %384 = vrot.lane.b32.xlu0 %v362, 32
    %v385 = vpop.permute.xlu0 %384
    %388 = vrot.lane.b32.xlu0 %v382, 64
    %v389 = vpop.permute.xlu0 %388
    %v391 = vsel %vm40, %v385, %v389
    %v393 = vrot.slane %v391, 2
    %v394 = vsel %vm113, %v393, 0
    %396 = vmatpush.msra.mxu0 0.0
    %397 = vmatpush.msra.mxu0 0.0
    %398 = vmatpush.msra.mxu0 0.0
    %399 = vmatpush.msra.mxu0 0.0
    %400 = vmatpush.msra.mxu0 0.0
    %401 = vmatpush.msra.mxu0 0.0
    %402 = vmatpush.msra.mxu0 0.0
    %403 = vmatpush.msra.mxu0 0.0
    %404 = vmatpush.msra.mxu0 %v111
    %405 = vmatpush.msra.mxu0 %v109
    %406 = vmatpush.msra.mxu0 %v107
    %407 = vmatpush.msra.mxu0 %v105
    %408 = vmatpush.msra.mxu0 %v103
    %409 = vmatpush.msra.mxu0 %v101
    %410 = vmatpush.msra.mxu0 %v99
    %411 = vmatpush.msra.mxu0 %v97
    %412 = vmatmul.f32.gmra.mxu0 %v394
    %v413 = vpop.f32.mrf.mxu0
    %v414 = vadd.f32 0.0, %v413
    %415 = vdwg.mxu0
    %416 = vmatpush.msra.mxu0 0.0
    %417 = vmatpush.msra.mxu0 0.0
    %418 = vmatpush.msra.mxu0 0.0
    %419 = vmatpush.msra.mxu0 0.0
    %420 = vmatpush.msra.mxu0 0.0
    %421 = vmatpush.msra.mxu0 0.0
    %422 = vmatpush.msra.mxu0 0.0
    %423 = vmatpush.msra.mxu0 0.0
    %424 = vmatpush.msra.mxu0 %v112
    %425 = vmatpush.msra.mxu0 %v110
    %426 = vmatpush.msra.mxu0 %v108
    %427 = vmatpush.msra.mxu0 %v106
    %428 = vmatpush.msra.mxu0 %v104
    %429 = vmatpush.msra.mxu0 %v102
    %430 = vmatpush.msra.mxu0 %v100
    %431 = vmatpush.msra.mxu0 %v98
    %432 = vmatmul.f32.gmra.mxu0 %v394
    %v433 = vpop.f32.mrf.mxu0
    %v434 = vadd.f32 0.0, %v433
    %435 = vdwg.mxu0
    %v436 = vld [vmem:[#allocation2] sm:$0x30]
    %v437 = vld [vmem:[#allocation2 + $0x18] sm:$0xc]
    %v439 = vrot.slane %v437, 6
    %v443 = vrot.slane %v414, 4
    %v444 = vrot.slane %v434, 4
    %v447 = vadd.f32 %v436, %v443
    %v448 = vadd.f32 %v439, %v444
    %v449 = vxor.u32 %v447, 2147483648
    %v450 = vxor.u32 %v448, 2147483648
    %v451 = vmul.f32 %v449, 1.442695
    %v452 = vpow.pop %v451
    %v453 = vmul.f32 %v450, 1.442695
    %v454 = vpow.pop %v453
    %v455 = vadd.f32 %v452, 1.0
    %v456 = vadd.f32 %v454, 1.0
    %v457 = vrcp.pop %v455
    %v458 = vmul.f32 %v455, %v457
    %v459 = vsub.f32 1.0, %v458
    %v460 = vmul.f32 %v457, %v459
    %v461 = vadd.f32 %v457, %v460
    %vm462 = vweird.f32 %v455
    %vm463 = vweird.f32 %v457
    %vm464 = vmor %vm462, %vm463
    %v465 = vsel %vm464, %v457, %v461
    %v466 = vand.u32 2147483647, %v455
    %vm467 = vcmp.eq.f32.partialorder %v466, 8.507059e+37
    %v468 = vand.u32 %v455, 2147483648
    %v469 = vor.u32 1.1754944e-38, %v468
    %v470 = vsel %vm467, %v469, %v465
    %v471 = vmul.f32 1.0, %v470
    %v472 = vrcp.pop %v456
    %v473 = vmul.f32 %v456, %v472
    %v474 = vsub.f32 1.0, %v473
    %v475 = vmul.f32 %v472, %v474
    %v476 = vadd.f32 %v472, %v475
    %vm477 = vweird.f32 %v456
    %vm478 = vweird.f32 %v472
    %vm479 = vmor %vm477, %vm478
    %v480 = vsel %vm479, %v472, %v476
    %v481 = vand.u32 2147483647, %v456
    %vm482 = vcmp.eq.f32.partialorder %v481, 8.507059e+37
    %v483 = vand.u32 %v456, 2147483648
    %v484 = vor.u32 1.1754944e-38, %v483
    %v485 = vsel %vm482, %v484, %v480
    %v486 = vmul.f32 1.0, %v485
    %v487 = vtanh.pop %v447
    %v488 = vtanh.pop %v448
    %v490 = vrot.slane %v356, 6
    %v492 = vmul.f32 %v471, %v490
    %494 = vrot.lane.b32.xlu0 %v487, 64
    %v495 = vpop.permute.xlu0 %494
    %v497 = vmul.f32 %v471, %v495
    %499 = vrot.lane.b32.xlu0 %v497, 32
    %v500 = vpop.permute.xlu0 %499
    %v502 = vadd.f32 %v492, %v500
    %v503 = vtanh.pop %v502
    %505 = vrot.lane.b32.xlu0 %v503, 64
    %v506 = vpop.permute.xlu0 %505
    %v508 = vmul.f32 %v471, %v506
    %v510 = vrot.slane %v376, 6
    %v512 = vmul.f32 %v486, %v510
    %514 = vrot.lane.b32.xlu0 %v488, 64
    %v515 = vpop.permute.xlu0 %514
    %v517 = vmul.f32 %v486, %v515
    %519 = vrot.lane.b32.xlu0 %v517, 32
    %v520 = vpop.permute.xlu0 %519
    %v522 = vadd.f32 %v512, %v520
    %v523 = vtanh.pop %v522
    %525 = vrot.lane.b32.xlu0 %v523, 64
    %v526 = vpop.permute.xlu0 %525
    %v528 = vmul.f32 %v486, %v526
    %530 = vrot.lane.b32.xlu0 %v508, 32
    %v531 = vpop.permute.xlu0 %530
    %534 = vrot.lane.b32.xlu0 %v528, 64
    %v535 = vpop.permute.xlu0 %534
    %v537 = vsel %vm40, %v531, %v535
    %v539 = vrot.slane %v537, 4
    %v540 = vsel %vm113, %v539, 0
    %542 = vmatpush.msra.mxu0 0.0
    %543 = vmatpush.msra.mxu0 0.0
    %544 = vmatpush.msra.mxu0 0.0
    %545 = vmatpush.msra.mxu0 0.0
    %546 = vmatpush.msra.mxu0 0.0
    %547 = vmatpush.msra.mxu0 0.0
    %548 = vmatpush.msra.mxu0 0.0
    %549 = vmatpush.msra.mxu0 0.0
    %550 = vmatpush.msra.mxu0 %v111
    %551 = vmatpush.msra.mxu0 %v109
    %552 = vmatpush.msra.mxu0 %v107
    %553 = vmatpush.msra.mxu0 %v105
    %554 = vmatpush.msra.mxu0 %v103
    %555 = vmatpush.msra.mxu0 %v101
    %556 = vmatpush.msra.mxu0 %v99
    %557 = vmatpush.msra.mxu0 %v97
    %558 = vmatmul.f32.gmra.mxu0 %v540
    %v559 = vpop.f32.mrf.mxu0
    %v560 = vadd.f32 0.0, %v559
    %561 = vdwg.mxu0
    %562 = vmatpush.msra.mxu0 0.0
    %563 = vmatpush.msra.mxu0 0.0
    %564 = vmatpush.msra.mxu0 0.0
    %565 = vmatpush.msra.mxu0 0.0
    %566 = vmatpush.msra.mxu0 0.0
    %567 = vmatpush.msra.mxu0 0.0
    %568 = vmatpush.msra.mxu0 0.0
    %569 = vmatpush.msra.mxu0 0.0
    %570 = vmatpush.msra.mxu0 %v112
    %571 = vmatpush.msra.mxu0 %v110
    %572 = vmatpush.msra.mxu0 %v108
    %573 = vmatpush.msra.mxu0 %v106
    %574 = vmatpush.msra.mxu0 %v104
    %575 = vmatpush.msra.mxu0 %v102
    %576 = vmatpush.msra.mxu0 %v100
    %577 = vmatpush.msra.mxu0 %v98
    %578 = vmatmul.f32.gmra.mxu0 %v540
    %v579 = vpop.f32.mrf.mxu0
    %v580 = vadd.f32 0.0, %v579
    %581 = vdwg.mxu0
    %v582 = vld [vmem:[#allocation2] sm:$0xc0]
    %v583 = vld [vmem:[#allocation2 + $0x18] sm:$0x3]
    %v585 = vrot.slane %v583, 2
    %v589 = vrot.slane %v560, 2
    %v590 = vrot.slane %v580, 2
    %v593 = vadd.f32 %v582, %v589
    %v594 = vadd.f32 %v585, %v590
    %v595 = vxor.u32 %v593, 2147483648
    %v596 = vxor.u32 %v594, 2147483648
    %v597 = vmul.f32 %v595, 1.442695
    %v598 = vpow.pop %v597
    %v599 = vmul.f32 %v596, 1.442695
    %v600 = vpow.pop %v599
    %v601 = vadd.f32 %v598, 1.0
    %v602 = vadd.f32 %v600, 1.0
    %v603 = vrcp.pop %v601
    %v604 = vmul.f32 %v601, %v603
    %v605 = vsub.f32 1.0, %v604
    %v606 = vmul.f32 %v603, %v605
    %v607 = vadd.f32 %v603, %v606
    %vm608 = vweird.f32 %v601
    %vm609 = vweird.f32 %v603
    %vm610 = vmor %vm608, %vm609
    %v611 = vsel %vm610, %v603, %v607
    %v612 = vand.u32 2147483647, %v601
    %vm613 = vcmp.eq.f32.partialorder %v612, 8.507059e+37
    %v614 = vand.u32 %v601, 2147483648
    %v615 = vor.u32 1.1754944e-38, %v614
    %v616 = vsel %vm613, %v615, %v611
    %v617 = vmul.f32 1.0, %v616
    %v618 = vrcp.pop %v602
    %v619 = vmul.f32 %v602, %v618
    %v620 = vsub.f32 1.0, %v619
    %v621 = vmul.f32 %v618, %v620
    %v622 = vadd.f32 %v618, %v621
    %vm623 = vweird.f32 %v602
    %vm624 = vweird.f32 %v618
    %vm625 = vmor %vm623, %vm624
    %v626 = vsel %vm625, %v618, %v622
    %v627 = vand.u32 2147483647, %v602
    %vm628 = vcmp.eq.f32.partialorder %v627, 8.507059e+37
    %v629 = vand.u32 %v602, 2147483648
    %v630 = vor.u32 1.1754944e-38, %v629
    %v631 = vsel %vm628, %v630, %v626
    %v632 = vmul.f32 1.0, %v631
    %v633 = vtanh.pop %v593
    %v634 = vtanh.pop %v594
    %v636 = vrot.slane %v502, 6
    %v638 = vmul.f32 %v617, %v636
    %640 = vrot.lane.b32.xlu0 %v633, 64
    %v641 = vpop.permute.xlu0 %640
    %v643 = vmul.f32 %v617, %v641
    %645 = vrot.lane.b32.xlu0 %v643, 32
    %v646 = vpop.permute.xlu0 %645
    %v648 = vadd.f32 %v638, %v646
    %v649 = vtanh.pop %v648
    %651 = vrot.lane.b32.xlu0 %v649, 64
    %v652 = vpop.permute.xlu0 %651
    %v654 = vmul.f32 %v617, %v652
    %v656 = vrot.slane %v522, 6
    %v658 = vmul.f32 %v632, %v656
    %660 = vrot.lane.b32.xlu0 %v634, 64
    %v661 = vpop.permute.xlu0 %660
    %v663 = vmul.f32 %v632, %v661
    %665 = vrot.lane.b32.xlu0 %v663, 32
    %v666 = vpop.permute.xlu0 %665
    %v668 = vadd.f32 %v658, %v666
    %v669 = vtanh.pop %v668
    %671 = vrot.lane.b32.xlu0 %v669, 64
    %v672 = vpop.permute.xlu0 %671
    %v674 = vmul.f32 %v632, %v672
    %676 = vrot.lane.b32.xlu0 %v654, 32
    %v677 = vpop.permute.xlu0 %676
    %680 = vrot.lane.b32.xlu0 %v674, 64
    %v681 = vpop.permute.xlu0 %680
    %v683 = vsel %vm40, %v677, %v681
    %v685 = vrot.slane %v683, 6
    %v686 = vsel %vm113, %v685, 0
    %688 = vmatpush.msra.mxu0 0.0
    %689 = vmatpush.msra.mxu0 0.0
    %690 = vmatpush.msra.mxu0 0.0
    %691 = vmatpush.msra.mxu0 0.0
    %692 = vmatpush.msra.mxu0 0.0
    %693 = vmatpush.msra.mxu0 0.0
    %694 = vmatpush.msra.mxu0 0.0
    %695 = vmatpush.msra.mxu0 0.0
    %696 = vmatpush.msra.mxu0 %v111
    %697 = vmatpush.msra.mxu0 %v109
    %698 = vmatpush.msra.mxu0 %v107
    %699 = vmatpush.msra.mxu0 %v105
    %700 = vmatpush.msra.mxu0 %v103
    %701 = vmatpush.msra.mxu0 %v101
    %702 = vmatpush.msra.mxu0 %v99
    %703 = vmatpush.msra.mxu0 %v97
    %704 = vmatmul.f32.gmra.mxu0 %v686
    %v705 = vpop.f32.mrf.mxu0
    %v706 = vadd.f32 0.0, %v705
    %707 = vdwg.mxu0
    %708 = vmatpush.msra.mxu0 0.0
    %709 = vmatpush.msra.mxu0 0.0
    %710 = vmatpush.msra.mxu0 0.0
    %711 = vmatpush.msra.mxu0 0.0
    %712 = vmatpush.msra.mxu0 0.0
    %713 = vmatpush.msra.mxu0 0.0
    %714 = vmatpush.msra.mxu0 0.0
    %715 = vmatpush.msra.mxu0 0.0
    %716 = vmatpush.msra.mxu0 %v112
    %717 = vmatpush.msra.mxu0 %v110
    %718 = vmatpush.msra.mxu0 %v108
    %719 = vmatpush.msra.mxu0 %v106
    %720 = vmatpush.msra.mxu0 %v104
    %721 = vmatpush.msra.mxu0 %v102
    %722 = vmatpush.msra.mxu0 %v100
    %723 = vmatpush.msra.mxu0 %v98
    %724 = vmatmul.f32.gmra.mxu0 %v686
    %v725 = vpop.f32.mrf.mxu0
    %v726 = vadd.f32 0.0, %v725
    %727 = vdwg.mxu0
    %v728 = vld [vmem:[#allocation2 + $0x10] sm:$0x3]
    %v729 = vld [vmem:[#allocation2 + $0x8] sm:$0xc0]
    %v731 = vrot.slane %v729, 6
    %v733 = vadd.f32 %v728, %v706
    %v734 = vadd.f32 %v731, %v726
    %v735 = vxor.u32 %v733, 2147483648
    %v736 = vxor.u32 %v734, 2147483648
    %v737 = vmul.f32 %v735, 1.442695
    %v738 = vpow.pop %v737
    %v739 = vmul.f32 %v736, 1.442695
    %v740 = vpow.pop %v739
    %v741 = vadd.f32 %v738, 1.0
    %v742 = vadd.f32 %v740, 1.0
    %v743 = vrcp.pop %v741
    %v744 = vmul.f32 %v741, %v743
    %v745 = vsub.f32 1.0, %v744
    %v746 = vmul.f32 %v743, %v745
    %v747 = vadd.f32 %v743, %v746
    %vm748 = vweird.f32 %v741
    %vm749 = vweird.f32 %v743
    %vm750 = vmor %vm748, %vm749
    %v751 = vsel %vm750, %v743, %v747
    %v752 = vand.u32 2147483647, %v741
    %vm753 = vcmp.eq.f32.partialorder %v752, 8.507059e+37
    %v754 = vand.u32 %v741, 2147483648
    %v755 = vor.u32 1.1754944e-38, %v754
    %v756 = vsel %vm753, %v755, %v751
    %v757 = vmul.f32 1.0, %v756
    %v758 = vrcp.pop %v742
    %v759 = vmul.f32 %v742, %v758
    %v760 = vsub.f32 1.0, %v759
    %v761 = vmul.f32 %v758, %v760
    %v762 = vadd.f32 %v758, %v761
    %vm763 = vweird.f32 %v742
    %vm764 = vweird.f32 %v758
    %vm765 = vmor %vm763, %vm764
    %v766 = vsel %vm765, %v758, %v762
    %v767 = vand.u32 2147483647, %v742
    %vm768 = vcmp.eq.f32.partialorder %v767, 8.507059e+37
    %v769 = vand.u32 %v742, 2147483648
    %v770 = vor.u32 1.1754944e-38, %v769
    %v771 = vsel %vm768, %v770, %v766
    %v772 = vmul.f32 1.0, %v771
    %v773 = vtanh.pop %v733
    %v774 = vtanh.pop %v734
    %v776 = vrot.slane %v648, 6
    %v778 = vmul.f32 %v757, %v776
    %780 = vrot.lane.b32.xlu0 %v773, 64
    %v781 = vpop.permute.xlu0 %780
    %v783 = vmul.f32 %v757, %v781
    %785 = vrot.lane.b32.xlu0 %v783, 32
    %v786 = vpop.permute.xlu0 %785
    %v788 = vadd.f32 %v778, %v786
    %v789 = vtanh.pop %v788
    %791 = vrot.lane.b32.xlu0 %v789, 64
    %v792 = vpop.permute.xlu0 %791
    %v794 = vmul.f32 %v757, %v792
    %v796 = vrot.slane %v668, 6
    %v798 = vmul.f32 %v772, %v796
    %800 = vrot.lane.b32.xlu0 %v774, 64
    %v801 = vpop.permute.xlu0 %800
    %v803 = vmul.f32 %v772, %v801
    %805 = vrot.lane.b32.xlu0 %v803, 32
    %v806 = vpop.permute.xlu0 %805
    %v808 = vadd.f32 %v798, %v806
    %v809 = vtanh.pop %v808
    %811 = vrot.lane.b32.xlu0 %v809, 64
    %v812 = vpop.permute.xlu0 %811
    %v814 = vmul.f32 %v772, %v812
    %816 = vrot.lane.b32.xlu0 %v794, 32
    %v817 = vpop.permute.xlu0 %816
    %820 = vrot.lane.b32.xlu0 %v814, 64
    %v821 = vpop.permute.xlu0 %820
    %v823 = vsel %vm40, %v817, %v821
    %v825 = vsel %vm113, %v823, 0
    %827 = vmatpush.msra.mxu0 0.0
    %828 = vmatpush.msra.mxu0 0.0
    %829 = vmatpush.msra.mxu0 0.0
    %830 = vmatpush.msra.mxu0 0.0
    %831 = vmatpush.msra.mxu0 0.0
    %832 = vmatpush.msra.mxu0 0.0
    %833 = vmatpush.msra.mxu0 0.0
    %834 = vmatpush.msra.mxu0 0.0
    %835 = vmatpush.msra.mxu0 %v111
    %836 = vmatpush.msra.mxu0 %v109
    %837 = vmatpush.msra.mxu0 %v107
    %838 = vmatpush.msra.mxu0 %v105
    %839 = vmatpush.msra.mxu0 %v103
    %840 = vmatpush.msra.mxu0 %v101
    %841 = vmatpush.msra.mxu0 %v99
    %842 = vmatpush.msra.mxu0 %v97
    %843 = vmatmul.f32.gmra.mxu0 %v825
    %v844 = vpop.f32.mrf.mxu0
    %v845 = vadd.f32 0.0, %v844
    %846 = vdwg.mxu0
    %847 = vmatpush.msra.mxu0 0.0
    %848 = vmatpush.msra.mxu0 0.0
    %849 = vmatpush.msra.mxu0 0.0
    %850 = vmatpush.msra.mxu0 0.0
    %851 = vmatpush.msra.mxu0 0.0
    %852 = vmatpush.msra.mxu0 0.0
    %853 = vmatpush.msra.mxu0 0.0
    %854 = vmatpush.msra.mxu0 0.0
    %855 = vmatpush.msra.mxu0 %v112
    %856 = vmatpush.msra.mxu0 %v110
    %857 = vmatpush.msra.mxu0 %v108
    %858 = vmatpush.msra.mxu0 %v106
    %859 = vmatpush.msra.mxu0 %v104
    %860 = vmatpush.msra.mxu0 %v102
    %861 = vmatpush.msra.mxu0 %v100
    %862 = vmatpush.msra.mxu0 %v98
    %863 = vmatmul.f32.gmra.mxu0 %v825
    %v864 = vpop.f32.mrf.mxu0
    %v865 = vadd.f32 0.0, %v864
    %866 = vdwg.mxu0
    %v867 = vld [vmem:[#allocation2 + $0x10] sm:$0xc]
    %v868 = vld [vmem:[#allocation2 + $0x8] sm:$0x30]
    %v870 = vrot.slane %v868, 2
    %v874 = vrot.slane %v845, 6
    %v875 = vrot.slane %v865, 6
    %v878 = vadd.f32 %v867, %v874
    %v879 = vadd.f32 %v870, %v875
    %v880 = vxor.u32 %v878, 2147483648
    %v881 = vxor.u32 %v879, 2147483648
    %v882 = vmul.f32 %v880, 1.442695
    %v883 = vpow.pop %v882
    %v884 = vmul.f32 %v881, 1.442695
    %v885 = vpow.pop %v884
    %v886 = vadd.f32 %v883, 1.0
    %v887 = vadd.f32 %v885, 1.0
    %v888 = vrcp.pop %v886
    %v889 = vmul.f32 %v886, %v888
    %v890 = vsub.f32 1.0, %v889
    %v891 = vmul.f32 %v888, %v890
    %v892 = vadd.f32 %v888, %v891
    %vm893 = vweird.f32 %v886
    %vm894 = vweird.f32 %v888
    %vm895 = vmor %vm893, %vm894
    %v896 = vsel %vm895, %v888, %v892
    %v897 = vand.u32 2147483647, %v886
    %vm898 = vcmp.eq.f32.partialorder %v897, 8.507059e+37
    %v899 = vand.u32 %v886, 2147483648
    %v900 = vor.u32 1.1754944e-38, %v899
    %v901 = vsel %vm898, %v900, %v896
    %v902 = vmul.f32 1.0, %v901
    %v903 = vrcp.pop %v887
    %v904 = vmul.f32 %v887, %v903
    %v905 = vsub.f32 1.0, %v904
    %v906 = vmul.f32 %v903, %v905
    %v907 = vadd.f32 %v903, %v906
    %vm908 = vweird.f32 %v887
    %vm909 = vweird.f32 %v903
    %vm910 = vmor %vm908, %vm909
    %v911 = vsel %vm910, %v903, %v907
    %v912 = vand.u32 2147483647, %v887
    %vm913 = vcmp.eq.f32.partialorder %v912, 8.507059e+37
    %v914 = vand.u32 %v887, 2147483648
    %v915 = vor.u32 1.1754944e-38, %v914
    %v916 = vsel %vm913, %v915, %v911
    %v917 = vmul.f32 1.0, %v916
    %v918 = vtanh.pop %v878
    %v919 = vtanh.pop %v879
    %v921 = vrot.slane %v788, 6
    %v923 = vmul.f32 %v902, %v921
    %925 = vrot.lane.b32.xlu0 %v918, 64
    %v926 = vpop.permute.xlu0 %925
    %v928 = vmul.f32 %v902, %v926
    %930 = vrot.lane.b32.xlu0 %v928, 32
    %v931 = vpop.permute.xlu0 %930
    %v933 = vadd.f32 %v923, %v931
    %v934 = vtanh.pop %v933
    %936 = vrot.lane.b32.xlu0 %v934, 64
    %v937 = vpop.permute.xlu0 %936
    %v939 = vmul.f32 %v902, %v937
    %v941 = vrot.slane %v808, 6
    %v943 = vmul.f32 %v917, %v941
    %945 = vrot.lane.b32.xlu0 %v919, 64
    %v946 = vpop.permute.xlu0 %945
    %v948 = vmul.f32 %v917, %v946
    %950 = vrot.lane.b32.xlu0 %v948, 32
    %v951 = vpop.permute.xlu0 %950
    %v953 = vadd.f32 %v943, %v951
    %v954 = vtanh.pop %v953
    %956 = vrot.lane.b32.xlu0 %v954, 64
    %v957 = vpop.permute.xlu0 %956
    %v959 = vmul.f32 %v917, %v957
    %961 = vrot.lane.b32.xlu0 %v939, 32
    %v962 = vpop.permute.xlu0 %961
    %965 = vrot.lane.b32.xlu0 %v959, 64
    %v966 = vpop.permute.xlu0 %965
    %v968 = vsel %vm40, %v962, %v966
    %v970 = vrot.slane %v968, 2
    %v971 = vsel %vm113, %v970, 0
    %973 = vmatpush.msra.mxu0 0.0
    %974 = vmatpush.msra.mxu0 0.0
    %975 = vmatpush.msra.mxu0 0.0
    %976 = vmatpush.msra.mxu0 0.0
    %977 = vmatpush.msra.mxu0 0.0
    %978 = vmatpush.msra.mxu0 0.0
    %979 = vmatpush.msra.mxu0 0.0
    %980 = vmatpush.msra.mxu0 0.0
    %981 = vmatpush.msra.mxu0 %v111
    %982 = vmatpush.msra.mxu0 %v109
    %983 = vmatpush.msra.mxu0 %v107
    %984 = vmatpush.msra.mxu0 %v105
    %985 = vmatpush.msra.mxu0 %v103
    %986 = vmatpush.msra.mxu0 %v101
    %987 = vmatpush.msra.mxu0 %v99
    %988 = vmatpush.msra.mxu0 %v97
    %989 = vmatmul.f32.gmra.mxu0 %v971
    %v990 = vpop.f32.mrf.mxu0
    %v991 = vadd.f32 0.0, %v990
    %992 = vdwg.mxu0
    %993 = vmatpush.msra.mxu0 0.0
    %994 = vmatpush.msra.mxu0 0.0
    %995 = vmatpush.msra.mxu0 0.0
    %996 = vmatpush.msra.mxu0 0.0
    %997 = vmatpush.msra.mxu0 0.0
    %998 = vmatpush.msra.mxu0 0.0
    %999 = vmatpush.msra.mxu0 0.0
    %1000 = vmatpush.msra.mxu0 0.0
    %1001 = vmatpush.msra.mxu0 %v112
    %1002 = vmatpush.msra.mxu0 %v110
    %1003 = vmatpush.msra.mxu0 %v108
    %1004 = vmatpush.msra.mxu0 %v106
    %1005 = vmatpush.msra.mxu0 %v104
    %1006 = vmatpush.msra.mxu0 %v102
    %1007 = vmatpush.msra.mxu0 %v100
    %1008 = vmatpush.msra.mxu0 %v98
    %1009 = vmatmul.f32.gmra.mxu0 %v971
    %v1010 = vpop.f32.mrf.mxu0
    %v1011 = vadd.f32 0.0, %v1010
    %1012 = vdwg.mxu0
    %v1013 = vld [vmem:[#allocation2 + $0x10] sm:$0x30]
    %v1014 = vld [vmem:[#allocation2 + $0x8] sm:$0xc]
    %v1016 = vrot.slane %v1014, 6
    %v1020 = vrot.slane %v991, 4
    %v1021 = vrot.slane %v1011, 4
    %v1024 = vadd.f32 %v1013, %v1020
    %v1025 = vadd.f32 %v1016, %v1021
    %v1026 = vxor.u32 %v1024, 2147483648
    %v1027 = vxor.u32 %v1025, 2147483648
    %v1028 = vmul.f32 %v1026, 1.442695
    %v1029 = vpow.pop %v1028
    %v1030 = vmul.f32 %v1027, 1.442695
    %v1031 = vpow.pop %v1030
    %v1032 = vadd.f32 %v1029, 1.0
    %v1033 = vadd.f32 %v1031, 1.0
    %v1034 = vrcp.pop %v1032
    %v1035 = vmul.f32 %v1032, %v1034
    %v1036 = vsub.f32 1.0, %v1035
    %v1037 = vmul.f32 %v1034, %v1036
    %v1038 = vadd.f32 %v1034, %v1037
    %vm1039 = vweird.f32 %v1032
    %vm1040 = vweird.f32 %v1034
    %vm1041 = vmor %vm1039, %vm1040
    %v1042 = vsel %vm1041, %v1034, %v1038
    %v1043 = vand.u32 2147483647, %v1032
    %vm1044 = vcmp.eq.f32.partialorder %v1043, 8.507059e+37
    %v1045 = vand.u32 %v1032, 2147483648
    %v1046 = vor.u32 1.1754944e-38, %v1045
    %v1047 = vsel %vm1044, %v1046, %v1042
    %v1048 = vmul.f32 1.0, %v1047
    %v1049 = vrcp.pop %v1033
    %v1050 = vmul.f32 %v1033, %v1049
    %v1051 = vsub.f32 1.0, %v1050
    %v1052 = vmul.f32 %v1049, %v1051
    %v1053 = vadd.f32 %v1049, %v1052
    %vm1054 = vweird.f32 %v1033
    %vm1055 = vweird.f32 %v1049
    %vm1056 = vmor %vm1054, %vm1055
    %v1057 = vsel %vm1056, %v1049, %v1053
    %v1058 = vand.u32 2147483647, %v1033
    %vm1059 = vcmp.eq.f32.partialorder %v1058, 8.507059e+37
    %v1060 = vand.u32 %v1033, 2147483648
    %v1061 = vor.u32 1.1754944e-38, %v1060
    %v1062 = vsel %vm1059, %v1061, %v1057
    %v1063 = vmul.f32 1.0, %v1062
    %v1064 = vtanh.pop %v1024
    %v1065 = vtanh.pop %v1025
    %v1067 = vrot.slane %v933, 6
    %v1069 = vmul.f32 %v1048, %v1067
    %1071 = vrot.lane.b32.xlu0 %v1064, 64
    %v1072 = vpop.permute.xlu0 %1071
    %v1074 = vmul.f32 %v1048, %v1072
    %1076 = vrot.lane.b32.xlu0 %v1074, 32
    %v1077 = vpop.permute.xlu0 %1076
    %v1079 = vadd.f32 %v1069, %v1077
    %v1080 = vtanh.pop %v1079
    %1082 = vrot.lane.b32.xlu0 %v1080, 64
    %v1083 = vpop.permute.xlu0 %1082
    %v1085 = vmul.f32 %v1048, %v1083
    %v1087 = vrot.slane %v953, 6
    %v1089 = vmul.f32 %v1063, %v1087
    %1091 = vrot.lane.b32.xlu0 %v1065, 64
    %v1092 = vpop.permute.xlu0 %1091
    %v1094 = vmul.f32 %v1063, %v1092
    %1096 = vrot.lane.b32.xlu0 %v1094, 32
    %v1097 = vpop.permute.xlu0 %1096
    %v1099 = vadd.f32 %v1089, %v1097
    %v1100 = vtanh.pop %v1099
    %1102 = vrot.lane.b32.xlu0 %v1100, 64
    %v1103 = vpop.permute.xlu0 %1102
    %v1105 = vmul.f32 %v1063, %v1103
    %1107 = vrot.lane.b32.xlu0 %v1085, 32
    %v1108 = vpop.permute.xlu0 %1107
    %1111 = vrot.lane.b32.xlu0 %v1105, 64
    %v1112 = vpop.permute.xlu0 %1111
    %v1114 = vsel %vm40, %v1108, %v1112
    %v1116 = vrot.slane %v1114, 4
    %v1117 = vsel %vm113, %v1116, 0
    %1119 = vmatpush.msra.mxu0 0.0
    %1120 = vmatpush.msra.mxu0 0.0
    %1121 = vmatpush.msra.mxu0 0.0
    %1122 = vmatpush.msra.mxu0 0.0
    %1123 = vmatpush.msra.mxu0 0.0
    %1124 = vmatpush.msra.mxu0 0.0
    %1125 = vmatpush.msra.mxu0 0.0
    %1126 = vmatpush.msra.mxu0 0.0
    %1127 = vmatpush.msra.mxu0 %v111
    %1128 = vmatpush.msra.mxu0 %v109
    %1129 = vmatpush.msra.mxu0 %v107
    %1130 = vmatpush.msra.mxu0 %v105
    %1131 = vmatpush.msra.mxu0 %v103
    %1132 = vmatpush.msra.mxu0 %v101
    %1133 = vmatpush.msra.mxu0 %v99
    %1134 = vmatpush.msra.mxu0 %v97
    %1135 = vmatmul.f32.gmra.mxu0 %v1117
    %v1136 = vpop.f32.mrf.mxu0
    %v1137 = vadd.f32 0.0, %v1136
    %1138 = vdwg.mxu0
    %1139 = vmatpush.msra.mxu0 0.0
    %1140 = vmatpush.msra.mxu0 0.0
    %1141 = vmatpush.msra.mxu0 0.0
    %1142 = vmatpush.msra.mxu0 0.0
    %1143 = vmatpush.msra.mxu0 0.0
    %1144 = vmatpush.msra.mxu0 0.0
    %1145 = vmatpush.msra.mxu0 0.0
    %1146 = vmatpush.msra.mxu0 0.0
    %1147 = vmatpush.msra.mxu0 %v112
    %1148 = vmatpush.msra.mxu0 %v110
    %1149 = vmatpush.msra.mxu0 %v108
    %1150 = vmatpush.msra.mxu0 %v106
    %1151 = vmatpush.msra.mxu0 %v104
    %1152 = vmatpush.msra.mxu0 %v102
    %1153 = vmatpush.msra.mxu0 %v100
    %1154 = vmatpush.msra.mxu0 %v98
    %1155 = vmatmul.f32.gmra.mxu0 %v1117
    %v1156 = vpop.f32.mrf.mxu0
    %v1157 = vadd.f32 0.0, %v1156
    %1158 = vdwg.mxu0
    %v1159 = vld [vmem:[#allocation2 + $0x10] sm:$0xc0]
    %v1160 = vld [vmem:[#allocation2 + $0x8] sm:$0x3]
    %v1162 = vrot.slane %v1160, 2
    %v1166 = vrot.slane %v1137, 2
    %v1167 = vrot.slane %v1157, 2
    %v1170 = vadd.f32 %v1159, %v1166
    %v1171 = vadd.f32 %v1162, %v1167
    %v1172 = vxor.u32 %v1170, 2147483648
    %v1173 = vxor.u32 %v1171, 2147483648
    %v1174 = vmul.f32 %v1172, 1.442695
    %v1175 = vpow.pop %v1174
    %v1176 = vmul.f32 %v1173, 1.442695
    %v1177 = vpow.pop %v1176
    %v1178 = vadd.f32 %v1175, 1.0
    %v1179 = vadd.f32 %v1177, 1.0
    %v1180 = vrcp.pop %v1178
    %v1181 = vmul.f32 %v1178, %v1180
    %v1182 = vsub.f32 1.0, %v1181
    %v1183 = vmul.f32 %v1180, %v1182
    %v1184 = vadd.f32 %v1180, %v1183
    %vm1185 = vweird.f32 %v1178
    %vm1186 = vweird.f32 %v1180
    %vm1187 = vmor %vm1185, %vm1186
    %v1188 = vsel %vm1187, %v1180, %v1184
    %v1189 = vand.u32 2147483647, %v1178
    %vm1190 = vcmp.eq.f32.partialorder %v1189, 8.507059e+37
    %v1191 = vand.u32 %v1178, 2147483648
    %v1192 = vor.u32 1.1754944e-38, %v1191
    %v1193 = vsel %vm1190, %v1192, %v1188
    %v1194 = vmul.f32 1.0, %v1193
    %v1195 = vrcp.pop %v1179
    %v1196 = vmul.f32 %v1179, %v1195
    %v1197 = vsub.f32 1.0, %v1196
    %v1198 = vmul.f32 %v1195, %v1197
    %v1199 = vadd.f32 %v1195, %v1198
    %vm1200 = vweird.f32 %v1179
    %vm1201 = vweird.f32 %v1195
    %vm1202 = vmor %vm1200, %vm1201
    %v1203 = vsel %vm1202, %v1195, %v1199
    %v1204 = vand.u32 2147483647, %v1179
    %vm1205 = vcmp.eq.f32.partialorder %v1204, 8.507059e+37
    %v1206 = vand.u32 %v1179, 2147483648
    %v1207 = vor.u32 1.1754944e-38, %v1206
    %v1208 = vsel %vm1205, %v1207, %v1203
    %v1209 = vmul.f32 1.0, %v1208
    %v1210 = vtanh.pop %v1170
    %v1211 = vtanh.pop %v1171
    %v1213 = vrot.slane %v1079, 6
    %v1215 = vmul.f32 %v1194, %v1213
    %1217 = vrot.lane.b32.xlu0 %v1210, 64
    %v1218 = vpop.permute.xlu0 %1217
    %v1220 = vmul.f32 %v1194, %v1218
    %1222 = vrot.lane.b32.xlu0 %v1220, 32
    %v1223 = vpop.permute.xlu0 %1222
    %v1225 = vadd.f32 %v1215, %v1223
    %v1226 = vtanh.pop %v1225
    %1228 = vrot.lane.b32.xlu0 %v1226, 64
    %v1229 = vpop.permute.xlu0 %1228
    %v1231 = vmul.f32 %v1194, %v1229
    %v1233 = vrot.slane %v1099, 6
    %v1235 = vmul.f32 %v1209, %v1233
    %1237 = vrot.lane.b32.xlu0 %v1211, 64
    %v1238 = vpop.permute.xlu0 %1237
    %v1240 = vmul.f32 %v1209, %v1238
    %1242 = vrot.lane.b32.xlu0 %v1240, 32
    %v1243 = vpop.permute.xlu0 %1242
    %v1245 = vadd.f32 %v1235, %v1243
    %v1246 = vtanh.pop %v1245
    %1248 = vrot.lane.b32.xlu0 %v1246, 64
    %v1249 = vpop.permute.xlu0 %1248
    %v1251 = vmul.f32 %v1209, %v1249
    %1253 = vrot.lane.b32.xlu0 %v1231, 32
    %v1254 = vpop.permute.xlu0 %1253
    %1257 = vrot.lane.b32.xlu0 %v1251, 64
    %v1258 = vpop.permute.xlu0 %1257
    %v1260 = vsel %vm40, %v1254, %v1258
    %v1261 = vrot.slane %v1251, 6
    %1262 = vrot.lane.b32.xlu0 %v1261, 64
    %v1263 = vpop.permute.xlu0 %1262
    %v1265 = vsel %vm40, %v240, %v1263
    %v1266 = vrot.slane %v1105, 2
    %1267 = vrot.lane.b32.xlu0 %v1266, 64
    %v1268 = vpop.permute.xlu0 %1267
    %v1270 = vsel %vm40, %v385, %v1268
    %v1271 = vrot.slane %v959, 6
    %1272 = vrot.lane.b32.xlu0 %v1271, 64
    %v1273 = vpop.permute.xlu0 %1272
    %v1275 = vsel %vm40, %v531, %v1273
    %v1276 = vrot.slane %v814, 2
    %1277 = vrot.lane.b32.xlu0 %v1276, 64
    %v1278 = vpop.permute.xlu0 %1277
    %v1280 = vsel %vm40, %v677, %v1278
    %v1281 = vrot.slane %v674, 6
    %1282 = vrot.lane.b32.xlu0 %v1281, 64
    %v1283 = vpop.permute.xlu0 %1282
    %v1285 = vsel %vm40, %v817, %v1283
    %v1286 = vrot.slane %v528, 2
    %1287 = vrot.lane.b32.xlu0 %v1286, 64
    %v1288 = vpop.permute.xlu0 %1287
    %v1290 = vsel %vm40, %v962, %v1288
    %v1291 = vrot.slane %v382, 6
    %1292 = vrot.lane.b32.xlu0 %v1291, 64
    %v1293 = vpop.permute.xlu0 %1292
    %v1295 = vsel %vm40, %v1108, %v1293
    %v1296 = vrot.slane %v237, 2
    %1297 = vrot.lane.b32.xlu0 %v1296, 64
    %v1298 = vpop.permute.xlu0 %1297
    %v1300 = vsel %vm40, %v1254, %v1298
    %v1302 = vrot.slane %v1260, 6
    %v1304 = vmul.f32 %v1265, %v1302
    %vm1305 = vcmask 517120
    %v1306 = vsel %vm1305, %v1304, 0.0
    %1307 = vadd.xlane.f32.xlu0 %v1306
    %v1308 = vpop.xlane.xlu0 %1307
    %v1309 = vrot.slane %v1260, 4
    %v1311 = vmul.f32 %v1270, %v1309
    %vm1312 = vcmask 519170
    %v1313 = vsel %vm1312, %v1311, 0.0
    %1314 = vadd.xlane.f32.xlu0 %v1313
    %v1315 = vpop.xlane.xlu0 %1314
    %v1316 = vrot.slane %v1260, 2
    %v1318 = vmul.f32 %v1275, %v1316
    %vm1319 = vcmask 521220
    %v1320 = vsel %vm1319, %v1318, 0.0
    %1321 = vadd.xlane.f32.xlu0 %v1320
    %v1322 = vpop.xlane.xlu0 %1321
    %v1323 = vmul.f32 %v1280, %v1260
    %vm1324 = vcmask 523270
    %v1325 = vsel %vm1324, %v1323, 0.0
    %1326 = vadd.xlane.f32.xlu0 %v1325
    %v1327 = vpop.xlane.xlu0 %1326
    %v1328 = vmul.f32 %v1285, %v1302
    %v1329 = vsel %vm1305, %v1328, 0.0
    %1330 = vadd.xlane.f32.xlu0 %v1329
    %v1331 = vpop.xlane.xlu0 %1330
    %v1332 = vmul.f32 %v1290, %v1309
    %v1333 = vsel %vm1312, %v1332, 0.0
    %1334 = vadd.xlane.f32.xlu0 %v1333
    %v1335 = vpop.xlane.xlu0 %1334
    %v1336 = vmul.f32 %v1295, %v1316
    %v1337 = vsel %vm1319, %v1336, 0.0
    %1338 = vadd.xlane.f32.xlu0 %v1337
    %v1339 = vpop.xlane.xlu0 %1338
    %v1340 = vmul.f32 %v1300, %v1260
    %v1341 = vsel %vm1324, %v1340, 0.0
    %1342 = vadd.xlane.f32.xlu0 %v1341
    %v1343 = vpop.xlane.xlu0 %1342
    %v1345 = vrot.slane %v1315, 2
    %v1348 = vrot.slane %v1322, 4
    %v1351 = vrot.slane %v1327, 6
    %v1354 = vrot.slane %v1335, 2
    %v1357 = vrot.slane %v1339, 4
    %v1360 = vrot.slane %v1343, 6
    %vm1362 = vcmask 7168
    %v1363 = vsel %vm1362, %v1308, %v1345
    %vm1364 = vcmask 15360
    %v1365 = vsel %vm1364, %v1363, %v1348
    %vm1366 = vcmask 23552
    %v1367 = vsel %vm1366, %v1365, %v1351
    %vm1368 = vcmask 31744
    %v1369 = vsel %vm1368, %v1367, %v1331
    %vm1370 = vcmask 39936
    %v1371 = vsel %vm1370, %v1369, %v1354
    %vm1372 = vcmask 48128
    %v1373 = vsel %vm1372, %v1371, %v1357
    %vm1374 = vcmask 56320
    %v1375 = vsel %vm1374, %v1373, %v1360
    %vm1376 = vcmask 58368
    %v1377 = vsel %vm1376, %v1375, -inf
    %1378 = vmax.xlane.f32.xlu0 %v1377
    %v1379 = vpop.xlane.xlu0 %1378
    %v1380 = vsub.f32 %v1375, %v1379
    %v1381 = vmul.f32 %v1380, 1.442695
    %v1382 = vpow.pop %v1381
    %v1383 = vsel %vm1376, %v1382, 0.0
    %1384 = vadd.xlane.f32.xlu0 %v1383
    %v1385 = vpop.xlane.xlu0 %1384
    %v1386 = vrcp.pop %v1385
    %v1387 = vmul.f32 %v1385, %v1386
    %v1388 = vsub.f32 1.0, %v1387
    %v1389 = vmul.f32 %v1386, %v1388
    %v1390 = vadd.f32 %v1386, %v1389
    %vm1391 = vweird.f32 %v1385
    %vm1392 = vweird.f32 %v1386
    %vm1393 = vmor %vm1391, %vm1392
    %v1394 = vsel %vm1393, %v1386, %v1390
    %v1395 = vand.u32 2147483647, %v1385
    %vm1396 = vcmp.eq.f32.partialorder %v1395, 8.507059e+37
    %v1397 = vand.u32 %v1385, 2147483648
    %v1398 = vor.u32 1.1754944e-38, %v1397
    %v1399 = vsel %vm1396, %v1398, %v1394
    %v1400 = vmul.f32 %v1382, %v1399
    %1402 = vset.pattern.permute.xlu0 0
    %1403 = vperm.xlu0 %1402, %v1400
    %v1404 = vpop.permute.xlu0 %1403
    %v1406 = vmul.f32 %v1265, %v1404
    %1407 = vset.pattern.permute.xlu0 1
    %1408 = vperm.xlu0 %1407, %v1400
    %v1409 = vpop.permute.xlu0 %1408
    %v1410 = vrot.slane %v1409, 6
    %v1412 = vmul.f32 %v1270, %v1410
    %v1414 = vrot.slane %v1412, 2
    %v1416 = vadd.f32 %v1406, %v1414
    %1417 = vset.pattern.permute.xlu0 2
    %1418 = vperm.xlu0 %1417, %v1400
    %v1419 = vpop.permute.xlu0 %1418
    %v1420 = vrot.slane %v1419, 4
    %v1422 = vmul.f32 %v1275, %v1420
    %v1424 = vrot.slane %v1422, 4
    %v1426 = vadd.f32 %v1416, %v1424
    %1427 = vset.pattern.permute.xlu0 3
    %1428 = vperm.xlu0 %1427, %v1400
    %v1429 = vpop.permute.xlu0 %1428
    %v1430 = vrot.slane %v1429, 2
    %v1432 = vmul.f32 %v1280, %v1430
    %v1434 = vrot.slane %v1432, 6
    %v1436 = vadd.f32 %v1426, %v1434
    %1437 = vset.pattern.permute.xlu0 4
    %1438 = vperm.xlu0 %1437, %v1400
    %v1439 = vpop.permute.xlu0 %1438
    %v1441 = vmul.f32 %v1285, %v1439
    %v1442 = vadd.f32 %v1436, %v1441
    %1443 = vset.pattern.permute.xlu0 5
    %1444 = vperm.xlu0 %1443, %v1400
    %v1445 = vpop.permute.xlu0 %1444
    %v1446 = vrot.slane %v1445, 6
    %v1448 = vmul.f32 %v1290, %v1446
    %v1450 = vrot.slane %v1448, 2
    %v1452 = vadd.f32 %v1442, %v1450
    %1453 = vset.pattern.permute.xlu0 6
    %1454 = vperm.xlu0 %1453, %v1400
    %v1455 = vpop.permute.xlu0 %1454
    %v1456 = vrot.slane %v1455, 4
    %v1458 = vmul.f32 %v1295, %v1456
    %v1460 = vrot.slane %v1458, 4
    %v1462 = vadd.f32 %v1452, %v1460
    %1463 = vset.pattern.permute.xlu0 7
    %1464 = vperm.xlu0 %1463, %v1400
    %v1465 = vpop.permute.xlu0 %1464
    %v1466 = vrot.slane %v1465, 2
    %v1468 = vmul.f32 %v1300, %v1466
    %v1470 = vrot.slane %v1468, 6
    %v1472 = vadd.f32 %v1462, %v1470
    %v1473 = vld [vmem:[%s4] sm:$0xff]
    %v1474 = vld [vmem:[%s4 + $0x8] sm:$0xff]
    %v1475 = vld [vmem:[%s4 + $0x10] sm:$0xff]
    %v1476 = vld [vmem:[%s4 + $0x18] sm:$0xff]
    %v1477 = vld [vmem:[%s4 + $0x20] sm:$0xff]
    %v1478 = vld [vmem:[%s4 + $0x28] sm:$0xff]
    %v1479 = vld [vmem:[%s4 + $0x30] sm:$0xff]
    %v1480 = vld [vmem:[%s4 + $0x38] sm:$0xff]
    %v1481 = vld [vmem:[%s4 + $0x40] sm:$0xff]
    %v1482 = vld [vmem:[%s4 + $0x48] sm:$0xff]
    %v1483 = vld [vmem:[%s4 + $0x50] sm:$0xff]
    %v1484 = vld [vmem:[%s4 + $0x58] sm:$0xff]
    %v1485 = vld [vmem:[%s4 + $0x60] sm:$0xff]
    %v1486 = vld [vmem:[%s4 + $0x68] sm:$0xff]
    %v1487 = vld [vmem:[%s4 + $0x70] sm:$0xff]
    %v1488 = vld [vmem:[%s4 + $0x78] sm:$0xff]
    %v1490 = vsel %vm113, %v1472, 0
    %1492 = vmatpush.msra.mxu0 0.0
    %1493 = vmatpush.msra.mxu0 0.0
    %1494 = vmatpush.msra.mxu0 0.0
    %1495 = vmatpush.msra.mxu0 0.0
    %1496 = vmatpush.msra.mxu0 0.0
    %1497 = vmatpush.msra.mxu0 0.0
    %1498 = vmatpush.msra.mxu0 0.0
    %1499 = vmatpush.msra.mxu0 0.0
    %1500 = vmatpush.msra.mxu0 %v1488
    %1501 = vmatpush.msra.mxu0 %v1487
    %1502 = vmatpush.msra.mxu0 %v1486
    %1503 = vmatpush.msra.mxu0 %v1485
    %1504 = vmatpush.msra.mxu0 %v1484
    %1505 = vmatpush.msra.mxu0 %v1483
    %1506 = vmatpush.msra.mxu0 %v1482
    %1507 = vmatpush.msra.mxu0 %v1481
    %1508 = vmatmul.f32.gmra.mxu0 %v1490
    %v1509 = vpop.f32.mrf.mxu0
    %v1510 = vadd.f32 0.0, %v1509
    %1511 = vdwg.mxu0
    %v1512 = vsel %vm113, %v1302, 0
    %1514 = vmatpush.msra.mxu0 0.0
    %1515 = vmatpush.msra.mxu0 0.0
    %1516 = vmatpush.msra.mxu0 0.0
    %1517 = vmatpush.msra.mxu0 0.0
    %1518 = vmatpush.msra.mxu0 0.0
    %1519 = vmatpush.msra.mxu0 0.0
    %1520 = vmatpush.msra.mxu0 0.0
    %1521 = vmatpush.msra.mxu0 0.0
    %1522 = vmatpush.msra.mxu0 %v1480
    %1523 = vmatpush.msra.mxu0 %v1479
    %1524 = vmatpush.msra.mxu0 %v1478
    %1525 = vmatpush.msra.mxu0 %v1477
    %1526 = vmatpush.msra.mxu0 %v1476
    %1527 = vmatpush.msra.mxu0 %v1475
    %1528 = vmatpush.msra.mxu0 %v1474
    %1529 = vmatpush.msra.mxu0 %v1473
    %1530 = vmatmul.f32.gmra.mxu0 %v1512
    %v1531 = vpop.f32.mrf.mxu0
    %v1532 = vadd.f32 %v1510, %v1531
    %1533 = vdwg.mxu0
    %v1534 = vld [vmem:[%s5] sm:$0x1]
    %v1536 = vperm.slane %v1534, 0
    %v1538 = vadd.f32 %v1532, %v1536
    %vm1539 = vcmask 25600
    %v1540 = vsel %vm1539, %v1538, -inf
    %1541 = vmax.xlane.f32.xlu0 %v1540
    %v1542 = vpop.xlane.xlu0 %1541
    %v1543 = vsub.f32 %v1538, %v1542
    %v1544 = vmul.f32 %v1543, 1.442695
    %v1545 = vpow.pop %v1544
    %v1546 = vsel %vm1539, %v1545, 0.0
    %1547 = vadd.xlane.f32.xlu0 %v1546
    %v1548 = vpop.xlane.xlu0 %1547
    %v1549 = vrcp.pop %v1548
    %v1550 = vmul.f32 %v1548, %v1549
    %v1551 = vsub.f32 1.0, %v1550
    %v1552 = vmul.f32 %v1549, %v1551
    %v1553 = vadd.f32 %v1549, %v1552
    %vm1554 = vweird.f32 %v1548
    %vm1555 = vweird.f32 %v1549
    %vm1556 = vmor %vm1554, %vm1555
    %v1557 = vsel %vm1556, %v1549, %v1553
    %v1558 = vand.u32 2147483647, %v1548
    %vm1559 = vcmp.eq.f32.partialorder %v1558, 8.507059e+37
    %v1560 = vand.u32 %v1548, 2147483648
    %v1561 = vor.u32 1.1754944e-38, %v1560
    %v1562 = vsel %vm1559, %v1561, %v1557
    %v1563 = vmul.f32 %v1545, %v1562
    %1564 = vst.msk [vmem:[#allocation3] sm:$0x3] %vm1539, %v1563
    // Predicated region
    $region26: #{seq2seq_attention_forward.1} parent=1 // pred_check
      _
    $region27: #{seq2seq_attention_forward.1} parent=1 // pred_check_branch
      %1566 = sbr.rel (0) target = $region29
    $region28: #{seq2seq_attention_forward.1} parent=1 // pred_region
      %1568 = vsyncadd [#allocation4], 0
      %s1570 = sshll.u32 [#allocation3], 4
      %s1571 = int_to_ptr.vmem [resolvable:$true] %s1570
      %s1572 = sshll.u32 %s6, 4
      %s1573 = int_to_ptr.hbm [resolvable:$true] %s1572
      %1575 = dma.vmem_to_hbm [thread:$0]  %s1571, 32, %s1573, [#allocation4]
    $region29: #{seq2seq_attention_forward.1} parent=1 // pred_fallthru
      _
    // Predicated region
    $region30: #{seq2seq_attention_forward.1} parent=1 // pred_check
      _
    $region31: #{seq2seq_attention_forward.1} parent=1 // pred_check_branch
      %1577 = sbr.rel (0) target = $region33
    $region32: #{seq2seq_attention_forward.1} parent=1 // pred_region
      %1579 = dma.done [#allocation4], 32
    $region33: #{seq2seq_attention_forward.1} parent=1 // pred_fallthru
      _
    %1580 = vsyncpa [#allocation4], 1

</llo_original>
